<compile_context>
chip_gen: v5e
topology: v5e:2x2
jax: 0.10.0
libtpu: 0.0.40
codegen_flags: <defaults>
</compile_context>

<pallas_src>
import functools

import jax
import jax.numpy as jnp
from jax.experimental import pallas as pl
from jax.experimental.pallas import tpu as pltpu


def _round_up(x, m):
    return (x + m - 1) // m * m


def clstm_cell_kernel(x_ref, h_ref, c_ref, w_ref, oh_ref, oc_ref,
                      src_ref, col_ref, a_ref, *, H, W, k, Cin, F):
    """One batch image of the ConvLSTM update, fully fused.

    x_ref  : (1, Cin, H*W)   input image  (channels on sublanes, H*W on lanes)
    h_ref  : (1, F,   H*W)   previous hidden state
    c_ref  : (1, F,   H*W)   previous cell state
    w_ref  : (4F, K)         packed conv weight, K = k*k*Ct_pad + 1 (bias row)
    oh_ref : (1, F, H*W)     next hidden state
    oc_ref : (1, F, H*W)     next cell state
    src_ref: (Ct_pad, SRC_W) scratch: vertically padded combined(x, h) image
    col_ref: (K, H*W)        scratch: im2col stack (+ ones row for the bias)
    a_ref  : (4F, H*W)       scratch: conv result (pre-activation gates)
    """
    f32 = jnp.float32
    pad = (k - 1) // 2
    Ct = Cin + F
    Ctp = src_ref.shape[0]                  # channel count padded to 8
    P = H * W
    kk = k * k

    # ---- concat(x, h) + vertical zero padding, fused into the kernel. -------
    # Buffer column (pad + r*W + c) holds padded-row r (r in [0, H+2*pad)),
    # image column c; rows r = 0 and r = H+2*pad-1 are the zero pad rows, plus
    # `pad` zero margin columns each side so every tap window below is
    # in-bounds.  Channel rows [Ct, Ctp) stay zero and are matched by zero
    # weight columns.
    src_ref[...] = jnp.zeros(src_ref.shape, f32)
    d0 = pad * (W + 1)                      # start of the real image rows
    src_ref[0:Cin, d0:d0 + P] = x_ref[0]
    src_ref[Cin:Ct, d0:d0 + P] = h_ref[0]

    # ---- im2col in VMEM: one lane-shifted window per conv tap. --------------
    # For interior output p = y*W + x and tap (kh, kw), the needed source
    # column is p + kh*W + (kw - pad).  Columns that would read horizontal
    # padding wrap into the neighbouring image row, so they are masked back to
    # the zero the padded conv expects.
    x_lane = jax.lax.broadcasted_iota(jnp.int32, (1, P), 1) % W
    for kh in range(k):
        for kw in range(k):
            t = kh * k + kw
            start = kh * W + kw
            win = src_ref[:, start:start + P]                  # (Ctp, P)
            lo, hi = pad - kw, W + pad - kw
            if lo > 0 or hi < W:
                valid = jnp.logical_and(x_lane >= lo, x_lane < hi)
                win = jnp.where(valid, win, 0.0)
            col_ref[t * Ctp:(t + 1) * Ctp, :] = win
    # Ones row: folds the conv bias (last weight column) into the matmul.
    col_ref[kk * Ctp:kk * Ctp + 1, :] = jnp.ones((1, P), f32)

    # ---- the whole k*k conv (+ bias) as ONE MXU matmul, f32 accumulation. ---
    a_ref[...] = jnp.dot(w_ref[...], col_ref[...],
                         preferred_element_type=f32)

    # ---- gate math + state update, streamed over 128-lane chunks. -----------
    for c0 in range(0, P, 128):
        c1 = min(c0 + 128, P)
        sl = slice(c0, c1)
        i = jax.nn.sigmoid(a_ref[0 * F:1 * F, sl])
        f = jax.nn.sigmoid(a_ref[1 * F:2 * F, sl])
        o = jax.nn.sigmoid(a_ref[2 * F:3 * F, sl])
        g = jnp.tanh(a_ref[3 * F:4 * F, sl])
        next_c = f * c_ref[0, :, sl] + i * g
        oh_ref[0, :, sl] = o * jnp.tanh(next_c)
        oc_ref[0, :, sl] = next_c


@functools.partial(jax.jit, static_argnums=(5, 6))
def clstm_cell_forward(x_nchw, h_nchw, c_nchw, weight_oihw, bias,
                       filter_size, num_features):
    """Pallas ConvLSTM cell forward. Inputs/outputs are NCHW (PyTorch layout)."""
    B, Cin, H, W = x_nchw.shape
    F = num_features
    k = filter_size
    pad = (k - 1) // 2
    Ct = Cin + F
    Ctp = _round_up(Ct, 8)                  # 8-aligned channel blocks
    P = H * W
    kk = k * k
    K = kk * Ctp + 1                        # +1 = folded bias row
    SRC_W = pad + (H + 2 * pad) * W + pad
    f32 = jnp.float32

    # Free reshapes only (last two NCHW dims collapse row-major).
    x_f = x_nchw.astype(f32).reshape(B, Cin, P)
    h_f = h_nchw.astype(f32).reshape(B, F, P)
    c_f = c_nchw.astype(f32).reshape(B, F, P)

    # One-time parameter repack (hoist out of the time loop for sequences):
    # OIHW -> (4F, kh, kw, Cin+F) -> zero-padded channel blocks -> (4F, K),
    # with the bias appended as the last column (matches the im2col ones row).
    w_t = jnp.transpose(weight_oihw.astype(f32), (0, 2, 3, 1)).reshape(4 * F, kk, Ct)
    w_p = jnp.zeros((4 * F, kk, Ctp), f32).at[:, :, :Ct].set(w_t)
    w_mat = jnp.concatenate(
        [w_p.reshape(4 * F, kk * Ctp), bias.astype(f32).reshape(4 * F, 1)], axis=1)

    kernel = functools.partial(clstm_cell_kernel, H=H, W=W, k=k, Cin=Cin, F=F)
    out_h, out_c = pl.pallas_call(
        kernel,
        out_shape=(jax.ShapeDtypeStruct((B, F, P), f32),
                   jax.ShapeDtypeStruct((B, F, P), f32)),
        grid_spec=pltpu.PrefetchScalarGridSpec(
            num_scalar_prefetch=0,
            grid=(B,),
            in_specs=[
                pl.BlockSpec((1, Cin, P), lambda b: (b, 0, 0)),
                pl.BlockSpec((1, F, P), lambda b: (b, 0, 0)),
                pl.BlockSpec((1, F, P), lambda b: (b, 0, 0)),
                pl.BlockSpec((4 * F, K), lambda b: (0, 0)),   # grid-invariant
            ],
            out_specs=[
                pl.BlockSpec((1, F, P), lambda b: (b, 0, 0)),
                pl.BlockSpec((1, F, P), lambda b: (b, 0, 0)),
            ],
            scratch_shapes=[
                pltpu.VMEM((Ctp, SRC_W), f32),     # padded combined image
                pltpu.VMEM((K, P), f32),           # im2col stack (+ ones row)
                pltpu.VMEM((4 * F, P), f32),       # pre-activation gates
            ],
        ),
        compiler_params=pltpu.CompilerParams(
            dimension_semantics=("parallel",)),
    )(x_f, h_f, c_f, w_mat)

    # Outputs already hold the H*W interior positions: free reshapes only.
    return out_h.reshape(B, F, H, W), out_c.reshape(B, F, H, W)


def _reference_forward(x, h, c, weight, bias, filter_size, num_features):
    """Pure-JAX reference matching the PyTorch module (NCHW / OIHW)."""
    pad = (filter_size - 1) // 2
    combined = jnp.concatenate([x, h], axis=1)
    A = jax.lax.conv_general_dilated(
        combined, weight, window_strides=(1, 1),
        padding=((pad, pad), (pad, pad)),
        dimension_numbers=("NCHW", "OIHW", "NCHW"))
    A = A + bias.reshape(1, -1, 1, 1)
    F = num_features
    ai, af, ao, ag = (A[:, 0 * F:1 * F], A[:, 1 * F:2 * F],
                      A[:, 2 * F:3 * F], A[:, 3 * F:4 * F])
    i = jax.nn.sigmoid(ai)
    f = jax.nn.sigmoid(af)
    o = jax.nn.sigmoid(ao)
    g = jnp.tanh(ag)
    next_c = f * c + i * g
    next_h = o * jnp.tanh(next_c)
    return next_h, next_c


if __name__ == "__main__":
    # Module config: shape=(16,16), input_chans=4, filter_size=3, num_features=32
    B, Cin, H, W = 2, 4, 16, 16
    filter_size = 3
    num_features = 32

    key = jax.random.PRNGKey(0)
    kx, kh, kc, kw, kb = jax.random.split(key, 5)

    x = jax.random.normal(kx, (B, Cin, H, W), dtype=jnp.float32)
    h0 = jax.random.normal(kh, (B, num_features, H, W), dtype=jnp.float32)
    c0 = jax.random.normal(kc, (B, num_features, H, W), dtype=jnp.float32)

    # Deterministic parameter init (nn.Conv2d shapes: OIHW weight + bias).
    in_ch = Cin + num_features
    fan_in = in_ch * filter_size * filter_size
    bound = 1.0 / jnp.sqrt(fan_in)
    weight = jax.random.uniform(
        kw, (4 * num_features, in_ch, filter_size, filter_size),
        minval=-bound, maxval=bound, dtype=jnp.float32)
    bias = jax.random.uniform(kb, (4 * num_features,),
                              minval=-bound, maxval=bound, dtype=jnp.float32)

    next_h, next_c = clstm_cell_forward(x, h0, c0, weight, bias,
                                        filter_size, num_features)
    jax.block_until_ready((next_h, next_c))

    ref_h, ref_c = _reference_forward(x, h0, c0, weight, bias,
                                      filter_size, num_features)
    assert next_h.shape == (B, num_features, H, W)
    assert next_c.shape == (B, num_features, H, W)
    # f32 operands / f32 accumulation; slight headroom for the bias-through-MXU
    # fold and the different (fused-K) accumulation order vs. the XLA conv.
    assert jnp.allclose(next_h, ref_h, atol=5e-4, rtol=5e-4)
    assert jnp.allclose(next_c, ref_c, atol=5e-4, rtol=5e-4)

    print("KERNEL_OK")
</pallas_src>

<mosaic_0001>
module attributes {stable_mosaic.version = 11 : i64} {
  func.func @clstm_cell_kernel(%arg0: i32, %arg1: memref<1x4x256xf32, #tpu.memory_space<vmem>>, %arg2: memref<1x32x256xf32, #tpu.memory_space<vmem>>, %arg3: memref<1x32x256xf32, #tpu.memory_space<vmem>>, %arg4: memref<128x361xf32, #tpu.memory_space<vmem>>, %arg5: memref<1x32x256xf32, #tpu.memory_space<vmem>>, %arg6: memref<1x32x256xf32, #tpu.memory_space<vmem>>, %arg7: memref<40x290xf32, #tpu.memory_space<vmem>>, %arg8: memref<361x256xf32, #tpu.memory_space<vmem>>, %arg9: memref<128x256xf32, #tpu.memory_space<vmem>>) attributes {dimension_semantics = [#tpu.dimension_semantics<parallel>], iteration_bounds = array<i64: 2>, scalar_prefetch = 0 : i64, scratch_operands = 3 : i64, tpu.core_type = #tpu.core_type<tc>, window_params = [{transform_indices = @transform_0, window_bounds = array<i64: 1, 4, 256>}, {transform_indices = @transform_1, window_bounds = array<i64: 1, 32, 256>}, {transform_indices = @transform_2, window_bounds = array<i64: 1, 32, 256>}, {pipeline_mode = #tpu.pipeline_mode<synchronous>, transform_indices = @transform_3, window_bounds = array<i64: 128, 361>}, {transform_indices = @transform_4, window_bounds = array<i64: 1, 32, 256>}, {transform_indices = @transform_5, window_bounds = array<i64: 1, 32, 256>}]} {
    %cst = arith.constant 0.000000e+00 : f32
    %0 = vector.broadcast %cst : f32 to vector<40x290xf32>
    %c0 = arith.constant 0 : index
    %c0_0 = arith.constant 0 : index
    %1 = vector.load %arg7[%c0, %c0_0] : memref<40x290xf32, #tpu.memory_space<vmem>>, vector<40x290xf32>
    tpu.vector_store %arg7[%c0, %c0_0], %0 {strides = array<i32>} : memref<40x290xf32, #tpu.memory_space<vmem>>, vector<40x290xf32>,
    %c0_1 = arith.constant 0 : index
    %c0_2 = arith.constant 0 : index
    %c0_3 = arith.constant 0 : index
    %2 = vector.load %arg1[%c0_1, %c0_2, %c0_3] : memref<1x4x256xf32, #tpu.memory_space<vmem>>, vector<1x4x256xf32>
    %3 = vector.shape_cast %2 : vector<1x4x256xf32> to vector<4x256xf32>
    %c0_4 = arith.constant 0 : index
    %c17 = arith.constant 17 : index
    %4 = vector.load %arg7[%c0_4, %c17] : memref<40x290xf32, #tpu.memory_space<vmem>>, vector<4x256xf32>
    tpu.vector_store %arg7[%c0_4, %c17], %3 {strides = array<i32>} : memref<40x290xf32, #tpu.memory_space<vmem>>, vector<4x256xf32>,
    %c0_5 = arith.constant 0 : index
    %c0_6 = arith.constant 0 : index
    %c0_7 = arith.constant 0 : index
    %5 = vector.load %arg2[%c0_5, %c0_6, %c0_7] : memref<1x32x256xf32, #tpu.memory_space<vmem>>, vector<1x32x256xf32>
    %6 = vector.shape_cast %5 : vector<1x32x256xf32> to vector<32x256xf32>
    %c4 = arith.constant 4 : index
    %c17_8 = arith.constant 17 : index
    %7 = vector.load %arg7[%c4, %c17_8] : memref<40x290xf32, #tpu.memory_space<vmem>>, vector<32x256xf32>
    tpu.vector_store %arg7[%c4, %c17_8], %6 {strides = array<i32>} : memref<40x290xf32, #tpu.memory_space<vmem>>, vector<32x256xf32>,
    %8 = tpu.iota {dimensions = array<i32: 1>} : vector<1x256xi32>
    %c16_i32 = arith.constant 16 : i32
    %c0_i32 = arith.constant 0 : i32
    %9 = arith.cmpi eq, %c16_i32, %c0_i32 : i32
    %c1_i32 = arith.constant 1 : i32
    %10 = arith.select %9, %c1_i32, %c16_i32 : i32
    %11 = vector.broadcast %10 : i32 to vector<1x256xi32>
    %12 = arith.remsi %8, %11 : vector<1x256xi32>
    %c0_i32_9 = arith.constant 0 : i32
    %13 = vector.broadcast %c0_i32_9 : i32 to vector<1x256xi32>
    %14 = arith.cmpi ne, %12, %13 : vector<1x256xi32>
    %c0_i32_10 = arith.constant 0 : i32
    %15 = vector.broadcast %c0_i32_10 : i32 to vector<1x256xi32>
    %16 = arith.cmpi slt, %12, %15 : vector<1x256xi32>
    %c0_i32_11 = arith.constant 0 : i32
    %17 = arith.cmpi slt, %10, %c0_i32_11 : i32
    %18 = vector.broadcast %17 : i1 to vector<1x256xi1>
    %19 = vector.broadcast %18 : vector<1x256xi1> to vector<1x256xi1>
    %20 = arith.xori %16, %19 : vector<1x256xi1>
    %21 = arith.andi %20, %14 : vector<1x256xi1>
    %22 = vector.broadcast %10 : i32 to vector<1x256xi32>
    %23 = arith.addi %12, %22 : vector<1x256xi32>
    %24 = arith.select %21, %23, %12 : vector<1x256xi1>, vector<1x256xi32>
    %c0_12 = arith.constant 0 : index
    %c0_13 = arith.constant 0 : index
    %25 = vector.load %arg7[%c0_12, %c0_13] : memref<40x290xf32, #tpu.memory_space<vmem>>, vector<40x256xf32>
    %c1_i32_14 = arith.constant 1 : i32
    %26 = vector.broadcast %c1_i32_14 : i32 to vector<1x256xi32>
    %27 = arith.cmpi sge, %24, %26 : vector<1x256xi32>
    %c17_i32 = arith.constant 17 : i32
    %28 = vector.broadcast %c17_i32 : i32 to vector<1x256xi32>
    %29 = arith.cmpi slt, %24, %28 : vector<1x256xi32>
    %30 = arith.andi %27, %29 : vector<1x256xi1>
    %cst_15 = arith.constant 0.000000e+00 : f32
    %31 = vector.shape_cast %30 : vector<1x256xi1> to vector<1x256xi1>
    %32 = vector.broadcast %31 : vector<1x256xi1> to vector<40x256xi1>
    %33 = vector.broadcast %cst_15 : f32 to vector<40x256xf32>
    %34 = arith.select %32, %25, %33 : vector<40x256xi1>, vector<40x256xf32>
    %c0_16 = arith.constant 0 : index
    %c0_17 = arith.constant 0 : index
    %35 = vector.load %arg8[%c0_16, %c0_17] : memref<361x256xf32, #tpu.memory_space<vmem>>, vector<40x256xf32>
    tpu.vector_store %arg8[%c0_16, %c0_17], %34 {strides = array<i32>} : memref<361x256xf32, #tpu.memory_space<vmem>>, vector<40x256xf32>,
    %c0_18 = arith.constant 0 : index
    %c1 = arith.constant 1 : index
    %36 = vector.load %arg7[%c0_18, %c1] : memref<40x290xf32, #tpu.memory_space<vmem>>, vector<40x256xf32>
    %c40 = arith.constant 40 : index
    %c0_19 = arith.constant 0 : index
    %37 = vector.load %arg8[%c40, %c0_19] : memref<361x256xf32, #tpu.memory_space<vmem>>, vector<40x256xf32>
    tpu.vector_store %arg8[%c40, %c0_19], %36 {strides = array<i32>} : memref<361x256xf32, #tpu.memory_space<vmem>>, vector<40x256xf32>,
    %c0_20 = arith.constant 0 : index
    %c2 = arith.constant 2 : index
    %38 = vector.load %arg7[%c0_20, %c2] : memref<40x290xf32, #tpu.memory_space<vmem>>, vector<40x256xf32>
    %c-1_i32 = arith.constant -1 : i32
    %39 = vector.broadcast %c-1_i32 : i32 to vector<1x256xi32>
    %40 = arith.cmpi sge, %24, %39 : vector<1x256xi32>
    %c15_i32 = arith.constant 15 : i32
    %41 = vector.broadcast %c15_i32 : i32 to vector<1x256xi32>
    %42 = arith.cmpi slt, %24, %41 : vector<1x256xi32>
    %43 = arith.andi %40, %42 : vector<1x256xi1>
    %cst_21 = arith.constant 0.000000e+00 : f32
    %44 = vector.shape_cast %43 : vector<1x256xi1> to vector<1x256xi1>
    %45 = vector.broadcast %44 : vector<1x256xi1> to vector<40x256xi1>
    %46 = vector.broadcast %cst_21 : f32 to vector<40x256xf32>
    %47 = arith.select %45, %38, %46 : vector<40x256xi1>, vector<40x256xf32>
    %c80 = arith.constant 80 : index
    %c0_22 = arith.constant 0 : index
    %48 = vector.load %arg8[%c80, %c0_22] : memref<361x256xf32, #tpu.memory_space<vmem>>, vector<40x256xf32>
    tpu.vector_store %arg8[%c80, %c0_22], %47 {strides = array<i32>} : memref<361x256xf32, #tpu.memory_space<vmem>>, vector<40x256xf32>,
    %c0_23 = arith.constant 0 : index
    %c16 = arith.constant 16 : index
    %49 = vector.load %arg7[%c0_23, %c16] : memref<40x290xf32, #tpu.memory_space<vmem>>, vector<40x256xf32>
    %c1_i32_24 = arith.constant 1 : i32
    %50 = vector.broadcast %c1_i32_24 : i32 to vector<1x256xi32>
    %51 = arith.cmpi sge, %24, %50 : vector<1x256xi32>
    %c17_i32_25 = arith.constant 17 : i32
    %52 = vector.broadcast %c17_i32_25 : i32 to vector<1x256xi32>
    %53 = arith.cmpi slt, %24, %52 : vector<1x256xi32>
    %54 = arith.andi %51, %53 : vector<1x256xi1>
    %cst_26 = arith.constant 0.000000e+00 : f32
    %55 = vector.shape_cast %54 : vector<1x256xi1> to vector<1x256xi1>
    %56 = vector.broadcast %55 : vector<1x256xi1> to vector<40x256xi1>
    %57 = vector.broadcast %cst_26 : f32 to vector<40x256xf32>
    %58 = arith.select %56, %49, %57 : vector<40x256xi1>, vector<40x256xf32>
    %c120 = arith.constant 120 : index
    %c0_27 = arith.constant 0 : index
    %59 = vector.load %arg8[%c120, %c0_27] : memref<361x256xf32, #tpu.memory_space<vmem>>, vector<40x256xf32>
    tpu.vector_store %arg8[%c120, %c0_27], %58 {strides = array<i32>} : memref<361x256xf32, #tpu.memory_space<vmem>>, vector<40x256xf32>,
    %c0_28 = arith.constant 0 : index
    %c17_29 = arith.constant 17 : index
    %60 = vector.load %arg7[%c0_28, %c17_29] : memref<40x290xf32, #tpu.memory_space<vmem>>, vector<40x256xf32>
    %c160 = arith.constant 160 : index
    %c0_30 = arith.constant 0 : index
    %61 = vector.load %arg8[%c160, %c0_30] : memref<361x256xf32, #tpu.memory_space<vmem>>, vector<40x256xf32>
    tpu.vector_store %arg8[%c160, %c0_30], %60 {strides = array<i32>} : memref<361x256xf32, #tpu.memory_space<vmem>>, vector<40x256xf32>,
    %c0_31 = arith.constant 0 : index
    %c18 = arith.constant 18 : index
    %62 = vector.load %arg7[%c0_31, %c18] : memref<40x290xf32, #tpu.memory_space<vmem>>, vector<40x256xf32>
    %c-1_i32_32 = arith.constant -1 : i32
    %63 = vector.broadcast %c-1_i32_32 : i32 to vector<1x256xi32>
    %64 = arith.cmpi sge, %24, %63 : vector<1x256xi32>
    %c15_i32_33 = arith.constant 15 : i32
    %65 = vector.broadcast %c15_i32_33 : i32 to vector<1x256xi32>
    %66 = arith.cmpi slt, %24, %65 : vector<1x256xi32>
    %67 = arith.andi %64, %66 : vector<1x256xi1>
    %cst_34 = arith.constant 0.000000e+00 : f32
    %68 = vector.shape_cast %67 : vector<1x256xi1> to vector<1x256xi1>
    %69 = vector.broadcast %68 : vector<1x256xi1> to vector<40x256xi1>
    %70 = vector.broadcast %cst_34 : f32 to vector<40x256xf32>
    %71 = arith.select %69, %62, %70 : vector<40x256xi1>, vector<40x256xf32>
    %c200 = arith.constant 200 : index
    %c0_35 = arith.constant 0 : index
    %72 = vector.load %arg8[%c200, %c0_35] : memref<361x256xf32, #tpu.memory_space<vmem>>, vector<40x256xf32>
    tpu.vector_store %arg8[%c200, %c0_35], %71 {strides = array<i32>} : memref<361x256xf32, #tpu.memory_space<vmem>>, vector<40x256xf32>,
    %c0_36 = arith.constant 0 : index
    %c32 = arith.constant 32 : index
    %73 = vector.load %arg7[%c0_36, %c32] : memref<40x290xf32, #tpu.memory_space<vmem>>, vector<40x256xf32>
    %c1_i32_37 = arith.constant 1 : i32
    %74 = vector.broadcast %c1_i32_37 : i32 to vector<1x256xi32>
    %75 = arith.cmpi sge, %24, %74 : vector<1x256xi32>
    %c17_i32_38 = arith.constant 17 : i32
    %76 = vector.broadcast %c17_i32_38 : i32 to vector<1x256xi32>
    %77 = arith.cmpi slt, %24, %76 : vector<1x256xi32>
    %78 = arith.andi %75, %77 : vector<1x256xi1>
    %cst_39 = arith.constant 0.000000e+00 : f32
    %79 = vector.shape_cast %78 : vector<1x256xi1> to vector<1x256xi1>
    %80 = vector.broadcast %79 : vector<1x256xi1> to vector<40x256xi1>
    %81 = vector.broadcast %cst_39 : f32 to vector<40x256xf32>
    %82 = arith.select %80, %73, %81 : vector<40x256xi1>, vector<40x256xf32>
    %c240 = arith.constant 240 : index
    %c0_40 = arith.constant 0 : index
    %83 = vector.load %arg8[%c240, %c0_40] : memref<361x256xf32, #tpu.memory_space<vmem>>, vector<40x256xf32>
    tpu.vector_store %arg8[%c240, %c0_40], %82 {strides = array<i32>} : memref<361x256xf32, #tpu.memory_space<vmem>>, vector<40x256xf32>,
    %c0_41 = arith.constant 0 : index
    %c33 = arith.constant 33 : index
    %84 = vector.load %arg7[%c0_41, %c33] : memref<40x290xf32, #tpu.memory_space<vmem>>, vector<40x256xf32>
    %c280 = arith.constant 280 : index
    %c0_42 = arith.constant 0 : index
    %85 = vector.load %arg8[%c280, %c0_42] : memref<361x256xf32, #tpu.memory_space<vmem>>, vector<40x256xf32>
    tpu.vector_store %arg8[%c280, %c0_42], %84 {strides = array<i32>} : memref<361x256xf32, #tpu.memory_space<vmem>>, vector<40x256xf32>,
    %c0_43 = arith.constant 0 : index
    %c34 = arith.constant 34 : index
    %86 = vector.load %arg7[%c0_43, %c34] : memref<40x290xf32, #tpu.memory_space<vmem>>, vector<40x256xf32>
    %c-1_i32_44 = arith.constant -1 : i32
    %87 = vector.broadcast %c-1_i32_44 : i32 to vector<1x256xi32>
    %88 = arith.cmpi sge, %24, %87 : vector<1x256xi32>
    %c15_i32_45 = arith.constant 15 : i32
    %89 = vector.broadcast %c15_i32_45 : i32 to vector<1x256xi32>
    %90 = arith.cmpi slt, %24, %89 : vector<1x256xi32>
    %91 = arith.andi %88, %90 : vector<1x256xi1>
    %cst_46 = arith.constant 0.000000e+00 : f32
    %92 = vector.shape_cast %91 : vector<1x256xi1> to vector<1x256xi1>
    %93 = vector.broadcast %92 : vector<1x256xi1> to vector<40x256xi1>
    %94 = vector.broadcast %cst_46 : f32 to vector<40x256xf32>
    %95 = arith.select %93, %86, %94 : vector<40x256xi1>, vector<40x256xf32>
    %c320 = arith.constant 320 : index
    %c0_47 = arith.constant 0 : index
    %96 = vector.load %arg8[%c320, %c0_47] : memref<361x256xf32, #tpu.memory_space<vmem>>, vector<40x256xf32>
    tpu.vector_store %arg8[%c320, %c0_47], %95 {strides = array<i32>} : memref<361x256xf32, #tpu.memory_space<vmem>>, vector<40x256xf32>,
    %cst_48 = arith.constant 1.000000e+00 : f32
    %97 = vector.broadcast %cst_48 : f32 to vector<1x256xf32>
    %c360 = arith.constant 360 : index
    %c0_49 = arith.constant 0 : index
    %98 = vector.load %arg8[%c360, %c0_49] : memref<361x256xf32, #tpu.memory_space<vmem>>, vector<1x256xf32>
    tpu.vector_store %arg8[%c360, %c0_49], %97 {strides = array<i32>} : memref<361x256xf32, #tpu.memory_space<vmem>>, vector<1x256xf32>,
    %c0_50 = arith.constant 0 : index
    %c0_51 = arith.constant 0 : index
    %99 = vector.load %arg4[%c0_50, %c0_51] : memref<128x361xf32, #tpu.memory_space<vmem>>, vector<128x361xf32>
    %c0_52 = arith.constant 0 : index
    %c0_53 = arith.constant 0 : index
    %100 = vector.load %arg8[%c0_52, %c0_53] : memref<361x256xf32, #tpu.memory_space<vmem>>, vector<361x256xf32>
    %cst_54 = arith.constant dense<0.000000e+00> : vector<128x256xf32>
    %101 = tpu.matmul %99, %100, %cst_54 {dimension_numbers = #tpu.dot_dimension_numbers<[1], [0], [0], [1], [0, 0, 1, 1], [], []>} : vector<128x361xf32>, vector<361x256xf32>, vector<128x256xf32> -> vector<128x256xf32>
    %c0_55 = arith.constant 0 : index
    %c0_56 = arith.constant 0 : index
    %102 = vector.load %arg9[%c0_55, %c0_56] : memref<128x256xf32, #tpu.memory_space<vmem>>, vector<128x256xf32>
    tpu.vector_store %arg9[%c0_55, %c0_56], %101 {strides = array<i32>} : memref<128x256xf32, #tpu.memory_space<vmem>>, vector<128x256xf32>,
    %c0_57 = arith.constant 0 : index
    %c0_58 = arith.constant 0 : index
    %103 = vector.load %arg9[%c0_57, %c0_58] : memref<128x256xf32, #tpu.memory_space<vmem>>, vector<32x128xf32>
    %104 = arith.negf %103 : vector<32x128xf32>
    %105 = math.exp %104 : vector<32x128xf32>
    %cst_59 = arith.constant 1.000000e+00 : f32
    %106 = vector.broadcast %cst_59 : f32 to vector<32x128xf32>
    %107 = arith.addf %106, %105 : vector<32x128xf32>
    %108 = arith.divf %106, %107 : vector<32x128xf32>
    %c32_60 = arith.constant 32 : index
    %c0_61 = arith.constant 0 : index
    %109 = vector.load %arg9[%c32_60, %c0_61] : memref<128x256xf32, #tpu.memory_space<vmem>>, vector<32x128xf32>
    %110 = arith.negf %109 : vector<32x128xf32>
    %111 = math.exp %110 : vector<32x128xf32>
    %cst_62 = arith.constant 1.000000e+00 : f32
    %112 = vector.broadcast %cst_62 : f32 to vector<32x128xf32>
    %113 = arith.addf %112, %111 : vector<32x128xf32>
    %114 = arith.divf %112, %113 : vector<32x128xf32>
    %c64 = arith.constant 64 : index
    %c0_63 = arith.constant 0 : index
    %115 = vector.load %arg9[%c64, %c0_63] : memref<128x256xf32, #tpu.memory_space<vmem>>, vector<32x128xf32>
    %116 = arith.negf %115 : vector<32x128xf32>
    %117 = math.exp %116 : vector<32x128xf32>
    %cst_64 = arith.constant 1.000000e+00 : f32
    %118 = vector.broadcast %cst_64 : f32 to vector<32x128xf32>
    %119 = arith.addf %118, %117 : vector<32x128xf32>
    %120 = arith.divf %118, %119 : vector<32x128xf32>
    %c96 = arith.constant 96 : index
    %c0_65 = arith.constant 0 : index
    %121 = vector.load %arg9[%c96, %c0_65] : memref<128x256xf32, #tpu.memory_space<vmem>>, vector<32x128xf32>
    %122 = math.tanh %121 : vector<32x128xf32>
    %c0_66 = arith.constant 0 : index
    %c0_67 = arith.constant 0 : index
    %c0_68 = arith.constant 0 : index
    %123 = vector.load %arg3[%c0_66, %c0_67, %c0_68] : memref<1x32x256xf32, #tpu.memory_space<vmem>>, vector<1x32x128xf32>
    %124 = vector.shape_cast %123 : vector<1x32x128xf32> to vector<32x128xf32>
    %125 = arith.mulf %114, %124 : vector<32x128xf32>
    %126 = arith.mulf %108, %122 : vector<32x128xf32>
    %127 = arith.addf %125, %126 : vector<32x128xf32>
    %128 = math.tanh %127 : vector<32x128xf32>
    %129 = arith.mulf %120, %128 : vector<32x128xf32>
    %c0_69 = arith.constant 0 : index
    %c0_70 = arith.constant 0 : index
    %c0_71 = arith.constant 0 : index
    %130 = vector.load %arg5[%c0_69, %c0_70, %c0_71] : memref<1x32x256xf32, #tpu.memory_space<vmem>>, vector<1x32x128xf32>
    %131 = vector.shape_cast %130 : vector<1x32x128xf32> to vector<32x128xf32>
    %132 = vector.shape_cast %129 : vector<32x128xf32> to vector<1x32x128xf32>
    tpu.vector_store %arg5[%c0_69, %c0_70, %c0_71], %132 {strides = array<i32>} : memref<1x32x256xf32, #tpu.memory_space<vmem>>, vector<1x32x128xf32>,
    %c0_72 = arith.constant 0 : index
    %c0_73 = arith.constant 0 : index
    %c0_74 = arith.constant 0 : index
    %133 = vector.load %arg6[%c0_72, %c0_73, %c0_74] : memref<1x32x256xf32, #tpu.memory_space<vmem>>, vector<1x32x128xf32>
    %134 = vector.shape_cast %133 : vector<1x32x128xf32> to vector<32x128xf32>
    %135 = vector.shape_cast %127 : vector<32x128xf32> to vector<1x32x128xf32>
    tpu.vector_store %arg6[%c0_72, %c0_73, %c0_74], %135 {strides = array<i32>} : memref<1x32x256xf32, #tpu.memory_space<vmem>>, vector<1x32x128xf32>,
    %c0_75 = arith.constant 0 : index
    %c128 = arith.constant 128 : index
    %136 = vector.load %arg9[%c0_75, %c128] : memref<128x256xf32, #tpu.memory_space<vmem>>, vector<32x128xf32>
    %137 = arith.negf %136 : vector<32x128xf32>
    %138 = math.exp %137 : vector<32x128xf32>
    %cst_76 = arith.constant 1.000000e+00 : f32
    %139 = vector.broadcast %cst_76 : f32 to vector<32x128xf32>
    %140 = arith.addf %139, %138 : vector<32x128xf32>
    %141 = arith.divf %139, %140 : vector<32x128xf32>
    %c32_77 = arith.constant 32 : index
    %c128_78 = arith.constant 128 : index
    %142 = vector.load %arg9[%c32_77, %c128_78] : memref<128x256xf32, #tpu.memory_space<vmem>>, vector<32x128xf32>
    %143 = arith.negf %142 : vector<32x128xf32>
    %144 = math.exp %143 : vector<32x128xf32>
    %cst_79 = arith.constant 1.000000e+00 : f32
    %145 = vector.broadcast %cst_79 : f32 to vector<32x128xf32>
    %146 = arith.addf %145, %144 : vector<32x128xf32>
    %147 = arith.divf %145, %146 : vector<32x128xf32>
    %c64_80 = arith.constant 64 : index
    %c128_81 = arith.constant 128 : index
    %148 = vector.load %arg9[%c64_80, %c128_81] : memref<128x256xf32, #tpu.memory_space<vmem>>, vector<32x128xf32>
    %149 = arith.negf %148 : vector<32x128xf32>
    %150 = math.exp %149 : vector<32x128xf32>
    %cst_82 = arith.constant 1.000000e+00 : f32
    %151 = vector.broadcast %cst_82 : f32 to vector<32x128xf32>
    %152 = arith.addf %151, %150 : vector<32x128xf32>
    %153 = arith.divf %151, %152 : vector<32x128xf32>
    %c96_83 = arith.constant 96 : index
    %c128_84 = arith.constant 128 : index
    %154 = vector.load %arg9[%c96_83, %c128_84] : memref<128x256xf32, #tpu.memory_space<vmem>>, vector<32x128xf32>
    %155 = math.tanh %154 : vector<32x128xf32>
    %c0_85 = arith.constant 0 : index
    %c0_86 = arith.constant 0 : index
    %c128_87 = arith.constant 128 : index
    %156 = vector.load %arg3[%c0_85, %c0_86, %c128_87] : memref<1x32x256xf32, #tpu.memory_space<vmem>>, vector<1x32x128xf32>
    %157 = vector.shape_cast %156 : vector<1x32x128xf32> to vector<32x128xf32>
    %158 = arith.mulf %147, %157 : vector<32x128xf32>
    %159 = arith.mulf %141, %155 : vector<32x128xf32>
    %160 = arith.addf %158, %159 : vector<32x128xf32>
    %161 = math.tanh %160 : vector<32x128xf32>
    %162 = arith.mulf %153, %161 : vector<32x128xf32>
    %c0_88 = arith.constant 0 : index
    %c0_89 = arith.constant 0 : index
    %c128_90 = arith.constant 128 : index
    %163 = vector.load %arg5[%c0_88, %c0_89, %c128_90] : memref<1x32x256xf32, #tpu.memory_space<vmem>>, vector<1x32x128xf32>
    %164 = vector.shape_cast %163 : vector<1x32x128xf32> to vector<32x128xf32>
    %165 = vector.shape_cast %162 : vector<32x128xf32> to vector<1x32x128xf32>
    tpu.vector_store %arg5[%c0_88, %c0_89, %c128_90], %165 {strides = array<i32>} : memref<1x32x256xf32, #tpu.memory_space<vmem>>, vector<1x32x128xf32>,
    %c0_91 = arith.constant 0 : index
    %c0_92 = arith.constant 0 : index
    %c128_93 = arith.constant 128 : index
    %166 = vector.load %arg6[%c0_91, %c0_92, %c128_93] : memref<1x32x256xf32, #tpu.memory_space<vmem>>, vector<1x32x128xf32>
    %167 = vector.shape_cast %166 : vector<1x32x128xf32> to vector<32x128xf32>
    %168 = vector.shape_cast %160 : vector<32x128xf32> to vector<1x32x128xf32>
    tpu.vector_store %arg6[%c0_91, %c0_92, %c128_93], %168 {strides = array<i32>} : memref<1x32x256xf32, #tpu.memory_space<vmem>>, vector<1x32x128xf32>,
    return
  }
  func.func @transform_0(%arg0: i32) -> (i32, i32, i32) {
    %c0_i32 = arith.constant 0 : i32
    %c0_i32_0 = arith.constant 0 : i32
    %c0_i32_1 = arith.constant 0 : i32
    return %arg0, %c0_i32, %c0_i32_0 : i32, i32, i32
  }
  func.func @transform_1(%arg0: i32) -> (i32, i32, i32) {
    %c0_i32 = arith.constant 0 : i32
    %c0_i32_0 = arith.constant 0 : i32
    %c0_i32_1 = arith.constant 0 : i32
    return %arg0, %c0_i32, %c0_i32_0 : i32, i32, i32
  }
  func.func @transform_2(%arg0: i32) -> (i32, i32, i32) {
    %c0_i32 = arith.constant 0 : i32
    %c0_i32_0 = arith.constant 0 : i32
    %c0_i32_1 = arith.constant 0 : i32
    return %arg0, %c0_i32, %c0_i32_0 : i32, i32, i32
  }
  func.func @transform_3(%arg0: i32) -> (i32, i32) {
    %c0_i32 = arith.constant 0 : i32
    %c0_i32_0 = arith.constant 0 : i32
    %c0_i32_1 = arith.constant 0 : i32
    return %c0_i32, %c0_i32_0 : i32, i32
  }
  func.func @transform_4(%arg0: i32) -> (i32, i32, i32) {
    %c0_i32 = arith.constant 0 : i32
    %c0_i32_0 = arith.constant 0 : i32
    %c0_i32_1 = arith.constant 0 : i32
    return %arg0, %c0_i32, %c0_i32_0 : i32, i32, i32
  }
  func.func @transform_5(%arg0: i32) -> (i32, i32, i32) {
    %c0_i32 = arith.constant 0 : i32
    %c0_i32_0 = arith.constant 0 : i32
    %c0_i32_1 = arith.constant 0 : i32
    return %arg0, %c0_i32, %c0_i32_0 : i32, i32, i32
  }
}

</mosaic_0001>

<llo_original>
// kernel: clstm_cell_forward.1
$region0: #{clstm_cell_forward.1}
  #allocation0 [shape = 'u32[]', space=smem, size = 0x4, offset = 0x4, fixed_abs, tag = 'smem constant byte address 0x4 - core index']
  #allocation1 [shape = 'u32[72,128]{1,0:T(1,128)}', space=vmem, size = 0x9000, scoped, tag = 'internal scratch']
  #allocation2 [shape = 'f32[40,290]{1,0:T(8,128)}', space=vmem, size = 0xf000, scoped, tag = 'scratch operand']
  #allocation3 [shape = 'f32[361,256]{1,0:T(8,128)}', space=vmem, size = 0x5c000, scoped, tag = 'scratch operand']
  #allocation4 [shape = 'f32[128,256]{1,0:T(8,128)}', space=vmem, size = 0x20000, scoped, tag = 'scratch operand']
  %s0 = inlined_call_operand.vmem [shape: f32[2,4,256], index: 0, kind: input, shape index: {}]
  %s1 = inlined_call_operand.vmem [shape: f32[2,32,256], index: 1, kind: input, shape index: {}]
  %s2 = inlined_call_operand.vmem [shape: f32[2,32,256], index: 2, kind: input, shape index: {}]
  %s3 = inlined_call_operand.vmem [shape: f32[128,361], index: 3, kind: input, shape index: {}]
  %s4 = inlined_call_operand.vmem [shape: f32[2,32,256], index: 4, kind: output, shape index: {0}]
  %s5 = inlined_call_operand.vmem [shape: f32[2,32,256], index: 5, kind: output, shape index: {1}]
  %6 = xla_tuple %s4, %s5
  %s7 = sld [smem:[#allocation0]]
  $region57: #{clstm_cell_forward.1} parent=0
    _
  %s9 = ssub.s32 1, %s7
  %s10 = scalar_select 0, %s9, %s7
  loop: start=0, step=1, limit=4
  $region2: #{clstm_cell_forward.1} parent=0 // loop_pre_header
    _
  $region3: #{clstm_cell_forward.1} parent=0 // loop_header
    %s12 = sphi 0, %s16
    %p13 = scmp.ge.s32.totalorder %s12, 4
    %s22 = sphi 0, %s24
    %s25 = sphi 0, %s22
    %s26 = sphi 0, %s25
    %s42 = sphi 0, %s26
    %s48 = sphi 0, %s50
    %s51 = sphi 0, %s48
    %s52 = sphi 0, %s51
    %s68 = sphi 0, %s52
    %s74 = sphi 0, %s76
    %s77 = sphi 0, %s74
    %s78 = sphi 0, %s77
    %s94 = sphi 0, %s78
    %s98 = sphi 0, %s98
    %s100 = sphi 0, %s98
    %s101 = sphi 0, %s100
    %s115 = sphi 0, %s101
    %s121 = sphi 0, %s123
    %s124 = sphi 0, %s121
    %s125 = sphi 0, %s124
    %s141 = sphi 0, %s125
    %s147 = sphi 0, %s149
    %s150 = sphi 0, %s147
    %s151 = sphi 0, %s150
    %s167 = sphi 0, %s151
  $region4: #{clstm_cell_forward.1} parent=0 // loop_header_branch
    %15 = sbr.rel (%p13) target = $region8
  $region5: #{clstm_cell_forward.1} parent=0 // loop_body
    %s17 = ssub.s32 %s12, 1
    %s18 = ssub.s32 %s12, 2
    %s19 = sadd.s32 %s12, 1
    %s20 = ssub.s32 %s12, %s19
    %p21 = scmp.eq.s32.totalorder %s20, 0
    %s23 = sadd.s32 %s22, 1
    %s24 = scalar_select %p21, %s22, %s23
    %p27 = pneg %p21
    %p28 = scmp.eq.s32.totalorder %s12, 1
    %p29 = por %p27, %p28
    %p30 = scmp.ne.s32.totalorder %s22, %s25
    %p31 = scmp.eq.s32.totalorder %s12, 0
    %p32 = por %p30, %p31
    %p33 = scmp.ne.s32.totalorder %s22, %s25
    %p34 = scmp.eq.s32.totalorder %s17, 1
    %p35 = por %p33, %p34
    %p36 = scmp.ne.s32.totalorder %s25, %s26
    %p37 = scmp.eq.s32.totalorder %s17, 0
    %p38 = por %p36, %p37
    %p39 = scmp.ne.s32.totalorder %s25, %s26
    %p40 = scmp.eq.s32.totalorder %s18, 1
    %p41 = por %p39, %p40
    %p43 = scmp.ne.s32.totalorder %s26, %s42
    %p44 = scmp.eq.s32.totalorder %s18, 0
    %p45 = por %p43, %p44
    %s46 = ssub.s32 %s12, %s19
    %p47 = scmp.eq.s32.totalorder %s46, 0
    %s49 = sadd.s32 %s48, 1
    %s50 = scalar_select %p47, %s48, %s49
    %p53 = pneg %p47
    %p54 = scmp.eq.s32.totalorder %s12, 1
    %p55 = por %p53, %p54
    %p56 = scmp.ne.s32.totalorder %s48, %s51
    %p57 = scmp.eq.s32.totalorder %s12, 0
    %p58 = por %p56, %p57
    %p59 = scmp.ne.s32.totalorder %s48, %s51
    %p60 = scmp.eq.s32.totalorder %s17, 1
    %p61 = por %p59, %p60
    %p62 = scmp.ne.s32.totalorder %s51, %s52
    %p63 = scmp.eq.s32.totalorder %s17, 0
    %p64 = por %p62, %p63
    %p65 = scmp.ne.s32.totalorder %s51, %s52
    %p66 = scmp.eq.s32.totalorder %s18, 1
    %p67 = por %p65, %p66
    %p69 = scmp.ne.s32.totalorder %s52, %s68
    %p70 = scmp.eq.s32.totalorder %s18, 0
    %p71 = por %p69, %p70
    %s72 = ssub.s32 %s12, %s19
    %p73 = scmp.eq.s32.totalorder %s72, 0
    %s75 = sadd.s32 %s74, 1
    %s76 = scalar_select %p73, %s74, %s75
    %p79 = pneg %p73
    %p80 = scmp.eq.s32.totalorder %s12, 1
    %p81 = por %p79, %p80
    %p82 = scmp.ne.s32.totalorder %s74, %s77
    %p83 = scmp.eq.s32.totalorder %s12, 0
    %p84 = por %p82, %p83
    %p85 = scmp.ne.s32.totalorder %s74, %s77
    %p86 = scmp.eq.s32.totalorder %s17, 1
    %p87 = por %p85, %p86
    %p88 = scmp.ne.s32.totalorder %s77, %s78
    %p89 = scmp.eq.s32.totalorder %s17, 0
    %p90 = por %p88, %p89
    %p91 = scmp.ne.s32.totalorder %s77, %s78
    %p92 = scmp.eq.s32.totalorder %s18, 1
    %p93 = por %p91, %p92
    %p95 = scmp.ne.s32.totalorder %s78, %s94
    %p96 = scmp.eq.s32.totalorder %s18, 0
    %p97 = por %p95, %p96
    %s99 = sadd.s32 %s98, 1
    %p102 = scmp.eq.s32.totalorder %s12, 1
    %p103 = scmp.ne.s32.totalorder %s98, %s100
    %p104 = scmp.eq.s32.totalorder %s12, 0
    %p105 = por %p103, %p104
    %p106 = scmp.ne.s32.totalorder %s98, %s100
    %p107 = scmp.eq.s32.totalorder %s17, 1
    %p108 = por %p106, %p107
    %p109 = scmp.ne.s32.totalorder %s100, %s101
    %p110 = scmp.eq.s32.totalorder %s17, 0
    %p111 = por %p109, %p110
    %p112 = scmp.ne.s32.totalorder %s100, %s101
    %p113 = scmp.eq.s32.totalorder %s18, 1
    %p114 = por %p112, %p113
    %p116 = scmp.ne.s32.totalorder %s101, %s115
    %p117 = scmp.eq.s32.totalorder %s18, 0
    %p118 = por %p116, %p117
    %s119 = ssub.s32 %s12, %s19
    %p120 = scmp.eq.s32.totalorder %s119, 0
    %s122 = sadd.s32 %s121, 1
    %s123 = scalar_select %p120, %s121, %s122
    %p126 = pneg %p120
    %p127 = scmp.eq.s32.totalorder %s12, 1
    %p128 = por %p126, %p127
    %p129 = scmp.ne.s32.totalorder %s121, %s124
    %p130 = scmp.eq.s32.totalorder %s12, 0
    %p131 = por %p129, %p130
    %p132 = scmp.ne.s32.totalorder %s121, %s124
    %p133 = scmp.eq.s32.totalorder %s17, 1
    %p134 = por %p132, %p133
    %p135 = scmp.ne.s32.totalorder %s124, %s125
    %p136 = scmp.eq.s32.totalorder %s17, 0
    %p137 = por %p135, %p136
    %p138 = scmp.ne.s32.totalorder %s124, %s125
    %p139 = scmp.eq.s32.totalorder %s18, 1
    %p140 = por %p138, %p139
    %p142 = scmp.ne.s32.totalorder %s125, %s141
    %p143 = scmp.eq.s32.totalorder %s18, 0
    %p144 = por %p142, %p143
    %s145 = ssub.s32 %s12, %s19
    %p146 = scmp.eq.s32.totalorder %s145, 0
    %s148 = sadd.s32 %s147, 1
    %s149 = scalar_select %p146, %s147, %s148
    %p152 = pneg %p146
    %p153 = scmp.eq.s32.totalorder %s12, 1
    %p154 = por %p152, %p153
    %p155 = scmp.ne.s32.totalorder %s147, %s150
    %p156 = scmp.eq.s32.totalorder %s12, 0
    %p157 = por %p155, %p156
    %p158 = scmp.ne.s32.totalorder %s147, %s150
    %p159 = scmp.eq.s32.totalorder %s17, 1
    %p160 = por %p158, %p159
    %p161 = scmp.ne.s32.totalorder %s150, %s151
    %p162 = scmp.eq.s32.totalorder %s17, 0
    %p163 = por %p161, %p162
    %p164 = scmp.ne.s32.totalorder %s150, %s151
    %p165 = scmp.eq.s32.totalorder %s18, 1
    %p166 = por %p164, %p165
    %p168 = scmp.ne.s32.totalorder %s151, %s167
    %p169 = scmp.eq.s32.totalorder %s18, 0
    %p170 = por %p168, %p169
    %p171 = scmp.le.s32.totalorder 1, %s12
    %p172 = scmp.lt.s32.totalorder %s12, 3
    %p173 = pnand %p171, %p172
    %p174 = pneg %p173
    // Predicated region
    $region9: #{clstm_cell_forward.1} parent=5 // pred_check
      _
    $region10: #{clstm_cell_forward.1} parent=5 // pred_check_branch
      %176 = sbr.rel (%p173) target = $region12
    $region11: #{clstm_cell_forward.1} parent=5 // pred_region
      %s177 = ssub.s32 %s12, 1
      // Predicated region
      $region13: #{clstm_cell_forward.1} parent=11 // pred_check
        %p178 = pneg %p111
      $region14: #{clstm_cell_forward.1} parent=11 // pred_check_branch
        %180 = sbr.rel (%p178) target = $region16
      $region15: #{clstm_cell_forward.1} parent=11 // pred_region
        _
      $region16: #{clstm_cell_forward.1} parent=11 // pred_fallthru
        _
    $region12: #{clstm_cell_forward.1} parent=5 // pred_fallthru
      _
    %p181 = scmp.lt.s32.totalorder %s12, 2
    // Predicated region
    $region17: #{clstm_cell_forward.1} parent=5 // pred_check
      %p182 = pneg %p181
    $region18: #{clstm_cell_forward.1} parent=5 // pred_check_branch
      %184 = sbr.rel (%p182) target = $region20
    $region19: #{clstm_cell_forward.1} parent=5 // pred_region
      // Predicated region
      $region21: #{clstm_cell_forward.1} parent=19 // pred_check
        %p185 = pneg %p32
      $region22: #{clstm_cell_forward.1} parent=19 // pred_check_branch
        %187 = sbr.rel (%p185) target = $region24
      $region23: #{clstm_cell_forward.1} parent=19 // pred_region
        %p188 = scmp.lt.s32.totalorder %s12, 1
        %s189 = scalar_select %p188, %s12, 1
        %s190 = smul.addr %s189, 2
        %s191 = smul.addr %s190, 4
        %s192 = scalar_lea.vmem %s0, %s191
      $region24: #{clstm_cell_forward.1} parent=19 // pred_fallthru
        _
      // Predicated region
      $region25: #{clstm_cell_forward.1} parent=19 // pred_check
        %p193 = pneg %p58
      $region26: #{clstm_cell_forward.1} parent=19 // pred_check_branch
        %195 = sbr.rel (%p193) target = $region28
      $region27: #{clstm_cell_forward.1} parent=19 // pred_region
        %p196 = scmp.lt.s32.totalorder %s12, 1
        %s197 = scalar_select %p196, %s12, 1
        %s198 = smul.addr %s197, 8
        %s199 = smul.addr %s198, 8
        %s200 = scalar_lea.vmem %s1, %s199
      $region28: #{clstm_cell_forward.1} parent=19 // pred_fallthru
        _
      // Predicated region
      $region29: #{clstm_cell_forward.1} parent=19 // pred_check
        %p201 = pneg %p84
      $region30: #{clstm_cell_forward.1} parent=19 // pred_check_branch
        %203 = sbr.rel (%p201) target = $region32
      $region31: #{clstm_cell_forward.1} parent=19 // pred_region
        %p204 = scmp.lt.s32.totalorder %s12, 1
        %s205 = scalar_select %p204, %s12, 1
        %s206 = smul.addr %s205, 8
        %s207 = smul.addr %s206, 8
        %s208 = scalar_lea.vmem %s2, %s207
      $region32: #{clstm_cell_forward.1} parent=19 // pred_fallthru
        _
    $region20: #{clstm_cell_forward.1} parent=5 // pred_fallthru
      _
    %p209 = scmp.le.s32.totalorder 1, %s12
    %p210 = scmp.lt.s32.totalorder %s12, 3
    %p211 = pnand %p209, %p210
    %p212 = pneg %p211
    // Predicated region
    $region33: #{clstm_cell_forward.1} parent=5 // pred_check
      _
    $region34: #{clstm_cell_forward.1} parent=5 // pred_check_branch
      %214 = sbr.rel (%p211) target = $region36
    $region35: #{clstm_cell_forward.1} parent=5 // pred_region
      %s215 = ssub.s32 %s12, 1
      %p216 = scmp.lt.s32.totalorder %s17, 1
      %s217 = scalar_select %p216, %s17, 1
      %s218 = smul.addr %s217, 2
      %s219 = smul.addr %s218, 4
      %s220 = scalar_lea.vmem %s0, %s219
      %p221 = pneg %p38
      %p222 = pneg %p35
      %p223 = scmp.lt.s32.totalorder %s17, 1
      %s224 = scalar_select %p223, %s17, 1
      %s225 = smul.addr %s224, 8
      %s226 = smul.addr %s225, 8
      %s227 = scalar_lea.vmem %s1, %s226
      %p228 = pneg %p64
      %p229 = pneg %p61
      %p230 = scmp.lt.s32.totalorder %s17, 1
      %s231 = scalar_select %p230, %s17, 1
      %s232 = smul.addr %s231, 8
      %s233 = smul.addr %s232, 8
      %s234 = scalar_lea.vmem %s2, %s233
      %p235 = pneg %p90
      %p236 = pneg %p87
      %p237 = pneg %p111
      %p238 = pneg %p108
      %p239 = pneg %p137
      %p240 = pneg %p134
      %p241 = scmp.lt.s32.totalorder %s17, 1
      %s242 = scalar_select %p241, %s17, 1
      %s243 = smul.addr %s242, 8
      %s244 = smul.addr %s243, 8
      %s245 = scalar_lea.vmem %s4, %s244
      %p246 = pneg %p163
      %p247 = pneg %p160
      %p248 = scmp.lt.s32.totalorder %s17, 1
      %s249 = scalar_select %p248, %s17, 1
      %s250 = smul.addr %s249, 8
      %s251 = smul.addr %s250, 8
      %s252 = scalar_lea.vmem %s5, %s251
      %p253 = scmp.lt.s32.totalorder %s17, 1
      %s254 = scalar_select %p253, %s17, 1
      %s255 = smul.addr %s254, 2
      %s256 = smul.addr %s255, 4
      %s257 = scalar_lea.vmem %s0, %s256
      %p258 = scmp.lt.s32.totalorder %s17, 1
      %s259 = scalar_select %p258, %s17, 1
      %s260 = smul.addr %s259, 8
      %s261 = smul.addr %s260, 8
      %s262 = scalar_lea.vmem %s1, %s261
      %p263 = scmp.lt.s32.totalorder %s17, 1
      %s264 = scalar_select %p263, %s17, 1
      %s265 = smul.addr %s264, 8
      %s266 = smul.addr %s265, 8
      %s267 = scalar_lea.vmem %s2, %s266
      %p268 = scmp.lt.s32.totalorder %s17, 1
      %s269 = scalar_select %p268, %s17, 1
      %s270 = smul.addr %s269, 8
      %s271 = smul.addr %s270, 8
      %s272 = scalar_lea.vmem %s4, %s271
      %p273 = scmp.lt.s32.totalorder %s17, 1
      %s274 = scalar_select %p273, %s17, 1
      %s275 = smul.addr %s274, 8
      %s276 = smul.addr %s275, 8
      %s277 = scalar_lea.vmem %s5, %s276
      %278 = vst [vmem:[#allocation2] sm:$0xff] 0.0
      %279 = vst [vmem:[#allocation2 + $0x8] sm:$0xff] 0.0
      %vm280 = vcmask 277504
      %281 = vst.msk [vmem:[#allocation2 + $0x10] sm:$0xff] %vm280, 0.0
      %282 = vst [vmem:[#allocation2 + $0x18] sm:$0xff] 0.0
      %283 = vst [vmem:[#allocation2 + $0x20] sm:$0xff] 0.0
      %284 = vst.msk [vmem:[#allocation2 + $0x28] sm:$0xff] %vm280, 0.0
      %285 = vst [vmem:[#allocation2 + $0x30] sm:$0xff] 0.0
      %286 = vst [vmem:[#allocation2 + $0x38] sm:$0xff] 0.0
      %287 = vst.msk [vmem:[#allocation2 + $0x40] sm:$0xff] %vm280, 0.0
      %288 = vst [vmem:[#allocation2 + $0x48] sm:$0xff] 0.0
      %289 = vst [vmem:[#allocation2 + $0x50] sm:$0xff] 0.0
      %290 = vst.msk [vmem:[#allocation2 + $0x58] sm:$0xff] %vm280, 0.0
      %291 = vst [vmem:[#allocation2 + $0x60] sm:$0xff] 0.0
      %292 = vst [vmem:[#allocation2 + $0x68] sm:$0xff] 0.0
      %293 = vst.msk [vmem:[#allocation2 + $0x70] sm:$0xff] %vm280, 0.0
      %v294 = vld [vmem:[%s257] sm:$0xff]
      %296 = vst [vmem:[#allocation1] ss:$2 sm:$0xff] %v294
      %v297 = vld.sshfl [vmem:[#allocation1] sm:$0xff pattern:$0x75316420]
      %v298 = vld.sshfl [vmem:[#allocation1 + $0x8] sm:$0xff pattern:$0x75316420]
      %299 = vrot.lane.b32.xlu0 %v297, 17
      %v300 = vpop.permute.xlu0 %299
      %301 = vrot.lane.b32.xlu0 %v298, 17
      %v302 = vpop.permute.xlu0 %301
      %vm303 = vcmask 138240
      %v304 = vsel %vm303, %v300, %v302
      %vm308 = vcmask 1043592
      %309 = vst.msk [vmem:[#allocation2] sm:$0xf] %vm308, %v300
      %310 = vst [vmem:[#allocation2 + $0x8] sm:$0xf] %v304
      %vm311 = vcmask 134144
      %312 = vst.msk [vmem:[#allocation2 + $0x10] sm:$0xf] %vm311, %v302
      %v313 = vld [vmem:[%s262] sm:$0xff]
      %v314 = vld [vmem:[%s262 + $0x8] sm:$0xff]
      %v315 = vld [vmem:[%s262 + $0x10] sm:$0xff]
      %v316 = vld [vmem:[%s262 + $0x18] sm:$0xff]
      %v317 = vld [vmem:[%s262 + $0x20] sm:$0xff]
      %v318 = vld [vmem:[%s262 + $0x28] sm:$0xff]
      %v319 = vld [vmem:[%s262 + $0x30] sm:$0xff]
      %v320 = vld [vmem:[%s262 + $0x38] sm:$0xff]
      %vm329 = vcmask 1043456
      %v330 = vrot.slane %v313, 4
      %v331 = vrot.slane %v314, 4
      %v332 = vrot.slane %v315, 4
      %v333 = vsel %vm329, %v330, %v332
      %v334 = vrot.slane %v316, 4
      %v335 = vsel %vm329, %v331, %v334
      %v336 = vrot.slane %v317, 4
      %v337 = vsel %vm329, %v332, %v336
      %v338 = vrot.slane %v318, 4
      %v339 = vsel %vm329, %v334, %v338
      %v340 = vrot.slane %v319, 4
      %v341 = vsel %vm329, %v336, %v340
      %v342 = vrot.slane %v320, 4
      %v343 = vsel %vm329, %v338, %v342
      %344 = vrot.lane.b32.xlu0 %v330, 17
      %v345 = vpop.permute.xlu0 %344
      %346 = vrot.lane.b32.xlu0 %v331, 17
      %v347 = vpop.permute.xlu0 %346
      %348 = vrot.lane.b32.xlu0 %v333, 17
      %v349 = vpop.permute.xlu0 %348
      %350 = vrot.lane.b32.xlu0 %v335, 17
      %v351 = vpop.permute.xlu0 %350
      %352 = vrot.lane.b32.xlu0 %v337, 17
      %v353 = vpop.permute.xlu0 %352
      %354 = vrot.lane.b32.xlu0 %v339, 17
      %v355 = vpop.permute.xlu0 %354
      %356 = vrot.lane.b32.xlu0 %v341, 17
      %v357 = vpop.permute.xlu0 %356
      %358 = vrot.lane.b32.xlu0 %v343, 17
      %v359 = vpop.permute.xlu0 %358
      %360 = vrot.lane.b32.xlu0 %v340, 17
      %v361 = vpop.permute.xlu0 %360
      %362 = vrot.lane.b32.xlu0 %v342, 17
      %v363 = vpop.permute.xlu0 %362
      %v364 = vsel %vm303, %v345, %v347
      %v365 = vsel %vm303, %v349, %v351
      %v366 = vsel %vm303, %v353, %v355
      %v367 = vsel %vm303, %v357, %v359
      %v368 = vsel %vm303, %v361, %v363
      %vm384 = vcmask 1047692
      %385 = vst.msk [vmem:[#allocation2] sm:$0xf0] %vm384, %v345
      %386 = vst [vmem:[#allocation2 + $0x8] sm:$0xf0] %v364
      %vm387 = vcmask 138244
      %388 = vst.msk [vmem:[#allocation2 + $0x10] sm:$0xf0] %vm387, %v347
      %vm389 = vcmask 1047688
      %390 = vst.msk [vmem:[#allocation2 + $0x18] sm:$0xff] %vm389, %v349
      %391 = vst [vmem:[#allocation2 + $0x20] sm:$0xff] %v365
      %392 = vst.msk [vmem:[#allocation2 + $0x28] sm:$0xff] %vm303, %v351
      %393 = vst.msk [vmem:[#allocation2 + $0x30] sm:$0xff] %vm389, %v353
      %394 = vst [vmem:[#allocation2 + $0x38] sm:$0xff] %v366
      %395 = vst.msk [vmem:[#allocation2 + $0x40] sm:$0xff] %vm303, %v355
      %396 = vst.msk [vmem:[#allocation2 + $0x48] sm:$0xff] %vm389, %v357
      %397 = vst [vmem:[#allocation2 + $0x50] sm:$0xff] %v367
      %398 = vst.msk [vmem:[#allocation2 + $0x58] sm:$0xff] %vm303, %v359
      %399 = vst.msk [vmem:[#allocation2 + $0x60] sm:$0xf] %vm308, %v361
      %400 = vst [vmem:[#allocation2 + $0x68] sm:$0xf] %v368
      %401 = vst.msk [vmem:[#allocation2 + $0x70] sm:$0xf] %vm311, %v363
      %v402 = vlaneseq
      %v403 = vand.u32 %v402, 127
      %v404 = vadd.s32 %v403, 128
      %vm405 = vcmp.lt.s32.totalorder %v403, 0
      %v406 = vsub.s32 0, %v403
      %v407 = vsel %vm405, %v406, %v403
      %v408 = vshrl.u32 %v407, 4
      %v409 = vand.u32 %v407, 15
      %v410 = vsub.s32 0, %v409
      %v411 = vsel %vm405, %v410, %v409
      %vm412 = vcmp.lt.s32.totalorder %v404, 0
      %v413 = vsub.s32 0, %v404
      %v414 = vsel %vm412, %v413, %v404
      %v415 = vshrl.u32 %v414, 4
      %v416 = vand.u32 %v414, 15
      %v417 = vsub.s32 0, %v416
      %v418 = vsel %vm412, %v417, %v416
      %vm419 = vcmp.ne.s32.totalorder %v411, 0
      %vm420 = vcmp.ne.s32.totalorder %v418, 0
      %vm421 = vcmp.lt.s32.totalorder %v411, 0
      %vm422 = vcmp.lt.s32.totalorder %v418, 0
      %vm423 = vmand %vm421, %vm419
      %vm424 = vmand %vm422, %vm420
      %v425 = vadd.s32 %v411, 16
      %v426 = vadd.s32 %v418, 16
      %v427 = vsel %vm423, %v425, %v411
      %v428 = vsel %vm424, %v426, %v418
      %v429 = vld [vmem:[#allocation2] sm:$0xff]
      %v430 = vld [vmem:[#allocation2 + $0x8] sm:$0xff]
      %v431 = vld [vmem:[#allocation2 + $0x18] sm:$0xff]
      %v432 = vld [vmem:[#allocation2 + $0x20] sm:$0xff]
      %v433 = vld [vmem:[#allocation2 + $0x30] sm:$0xff]
      %v434 = vld [vmem:[#allocation2 + $0x38] sm:$0xff]
      %v435 = vld [vmem:[#allocation2 + $0x48] sm:$0xff]
      %v436 = vld [vmem:[#allocation2 + $0x50] sm:$0xff]
      %v437 = vld [vmem:[#allocation2 + $0x60] sm:$0xff]
      %v438 = vld [vmem:[#allocation2 + $0x68] sm:$0xff]
      %vm439 = vcmp.ge.s32.totalorder %v427, 1
      %vm440 = vcmp.ge.s32.totalorder %v428, 1
      %vm441 = vcmp.lt.s32.totalorder %v427, 17
      %vm442 = vcmp.lt.s32.totalorder %v428, 17
      %vm443 = vmand %vm439, %vm441
      %vm444 = vmand %vm440, %vm442
      %v445 = vsel %vm443, 1, 0
      %v446 = vsel %vm444, 1, 0
      %vm447 = vcmp.eq.s32.totalorder %v445, 1
      %vm448 = vcmp.eq.s32.totalorder %v446, 1
      %v449 = vsel %vm447, %v429, 0.0
      %v450 = vsel %vm448, %v430, 0.0
      %v451 = vsel %vm447, %v431, 0.0
      %v452 = vsel %vm448, %v432, 0.0
      %v453 = vsel %vm447, %v433, 0.0
      %v454 = vsel %vm448, %v434, 0.0
      %v455 = vsel %vm447, %v435, 0.0
      %v456 = vsel %vm448, %v436, 0.0
      %v457 = vsel %vm447, %v437, 0.0
      %v458 = vsel %vm448, %v438, 0.0
      %459 = vst [vmem:[#allocation3] sm:$0xff] %v449
      %460 = vst [vmem:[#allocation3 + $0x8] sm:$0xff] %v450
      %461 = vst [vmem:[#allocation3 + $0x10] sm:$0xff] %v451
      %462 = vst [vmem:[#allocation3 + $0x18] sm:$0xff] %v452
      %463 = vst [vmem:[#allocation3 + $0x20] sm:$0xff] %v453
      %464 = vst [vmem:[#allocation3 + $0x28] sm:$0xff] %v454
      %465 = vst [vmem:[#allocation3 + $0x30] sm:$0xff] %v455
      %466 = vst [vmem:[#allocation3 + $0x38] sm:$0xff] %v456
      %467 = vst [vmem:[#allocation3 + $0x40] sm:$0xff] %v457
      %468 = vst [vmem:[#allocation3 + $0x48] sm:$0xff] %v458
      %v469 = vld [vmem:[#allocation2] sm:$0xff]
      %v470 = vld [vmem:[#allocation2 + $0x8] sm:$0xff]
      %v471 = vld [vmem:[#allocation2 + $0x10] sm:$0xff]
      %v472 = vld [vmem:[#allocation2 + $0x18] sm:$0xff]
      %v473 = vld [vmem:[#allocation2 + $0x20] sm:$0xff]
      %v474 = vld [vmem:[#allocation2 + $0x28] sm:$0xff]
      %v475 = vld [vmem:[#allocation2 + $0x30] sm:$0xff]
      %v476 = vld [vmem:[#allocation2 + $0x38] sm:$0xff]
      %v477 = vld [vmem:[#allocation2 + $0x40] sm:$0xff]
      %v478 = vld [vmem:[#allocation2 + $0x48] sm:$0xff]
      %v479 = vld [vmem:[#allocation2 + $0x50] sm:$0xff]
      %v480 = vld [vmem:[#allocation2 + $0x58] sm:$0xff]
      %v481 = vld [vmem:[#allocation2 + $0x60] sm:$0xff]
      %v482 = vld [vmem:[#allocation2 + $0x68] sm:$0xff]
      %v483 = vld [vmem:[#allocation2 + $0x70] sm:$0xff]
      %499 = vrot.lane.b32.xlu0 %v469, 127
      %v500 = vpop.permute.xlu0 %499
      %501 = vrot.lane.b32.xlu0 %v470, 127
      %v502 = vpop.permute.xlu0 %501
      %503 = vrot.lane.b32.xlu0 %v471, 127
      %v504 = vpop.permute.xlu0 %503
      %505 = vrot.lane.b32.xlu0 %v472, 127
      %v506 = vpop.permute.xlu0 %505
      %507 = vrot.lane.b32.xlu0 %v473, 127
      %v508 = vpop.permute.xlu0 %507
      %509 = vrot.lane.b32.xlu0 %v474, 127
      %v510 = vpop.permute.xlu0 %509
      %511 = vrot.lane.b32.xlu0 %v475, 127
      %v512 = vpop.permute.xlu0 %511
      %513 = vrot.lane.b32.xlu0 %v476, 127
      %v514 = vpop.permute.xlu0 %513
      %515 = vrot.lane.b32.xlu0 %v477, 127
      %v516 = vpop.permute.xlu0 %515
      %517 = vrot.lane.b32.xlu0 %v478, 127
      %v518 = vpop.permute.xlu0 %517
      %519 = vrot.lane.b32.xlu0 %v479, 127
      %v520 = vpop.permute.xlu0 %519
      %521 = vrot.lane.b32.xlu0 %v480, 127
      %v522 = vpop.permute.xlu0 %521
      %523 = vrot.lane.b32.xlu0 %v481, 127
      %v524 = vpop.permute.xlu0 %523
      %525 = vrot.lane.b32.xlu0 %v482, 127
      %v526 = vpop.permute.xlu0 %525
      %527 = vrot.lane.b32.xlu0 %v483, 127
      %v528 = vpop.permute.xlu0 %527
      %vm529 = vcmask 1039360
      %v530 = vsel %vm529, %v500, %v502
      %v531 = vsel %vm529, %v502, %v504
      %v532 = vsel %vm529, %v506, %v508
      %v533 = vsel %vm529, %v508, %v510
      %v534 = vsel %vm529, %v512, %v514
      %v535 = vsel %vm529, %v514, %v516
      %v536 = vsel %vm529, %v518, %v520
      %v537 = vsel %vm529, %v520, %v522
      %v538 = vsel %vm529, %v524, %v526
      %v539 = vsel %vm529, %v526, %v528
      %550 = vst [vmem:[#allocation3 + $0x50] sm:$0xff] %v530
      %551 = vst [vmem:[#allocation3 + $0x58] sm:$0xff] %v531
      %552 = vst [vmem:[#allocation3 + $0x60] sm:$0xff] %v532
      %553 = vst [vmem:[#allocation3 + $0x68] sm:$0xff] %v533
      %554 = vst [vmem:[#allocation3 + $0x70] sm:$0xff] %v534
      %555 = vst [vmem:[#allocation3 + $0x78] sm:$0xff] %v535
      %556 = vst [vmem:[#allocation3 + $0x80] sm:$0xff] %v536
      %557 = vst [vmem:[#allocation3 + $0x88] sm:$0xff] %v537
      %558 = vst [vmem:[#allocation3 + $0x90] sm:$0xff] %v538
      %559 = vst [vmem:[#allocation3 + $0x98] sm:$0xff] %v539
      %v560 = vld [vmem:[#allocation2] sm:$0xff]
      %v561 = vld [vmem:[#allocation2 + $0x8] sm:$0xff]
      %v562 = vld [vmem:[#allocation2 + $0x10] sm:$0xff]
      %v563 = vld [vmem:[#allocation2 + $0x18] sm:$0xff]
      %v564 = vld [vmem:[#allocation2 + $0x20] sm:$0xff]
      %v565 = vld [vmem:[#allocation2 + $0x28] sm:$0xff]
      %v566 = vld [vmem:[#allocation2 + $0x30] sm:$0xff]
      %v567 = vld [vmem:[#allocation2 + $0x38] sm:$0xff]
      %v568 = vld [vmem:[#allocation2 + $0x40] sm:$0xff]
      %v569 = vld [vmem:[#allocation2 + $0x48] sm:$0xff]
      %v570 = vld [vmem:[#allocation2 + $0x50] sm:$0xff]
      %v571 = vld [vmem:[#allocation2 + $0x58] sm:$0xff]
      %v572 = vld [vmem:[#allocation2 + $0x60] sm:$0xff]
      %v573 = vld [vmem:[#allocation2 + $0x68] sm:$0xff]
      %v574 = vld [vmem:[#allocation2 + $0x70] sm:$0xff]
      %vm575 = vcmp.ge.s32.totalorder %v427, 4294967295
      %vm576 = vcmp.ge.s32.totalorder %v428, 4294967295
      %vm577 = vcmp.lt.s32.totalorder %v427, 15
      %vm578 = vcmp.lt.s32.totalorder %v428, 15
      %vm579 = vmand %vm575, %vm577
      %vm580 = vmand %vm576, %vm578
      %v581 = vsel %vm579, 1, 0
      %v582 = vsel %vm580, 1, 0
      %vm583 = vcmp.eq.s32.totalorder %v581, 1
      %vm584 = vcmp.eq.s32.totalorder %v582, 1
      %600 = vrot.lane.b32.xlu0 %v560, 126
      %v601 = vpop.permute.xlu0 %600
      %602 = vrot.lane.b32.xlu0 %v561, 126
      %v603 = vpop.permute.xlu0 %602
      %604 = vrot.lane.b32.xlu0 %v562, 126
      %v605 = vpop.permute.xlu0 %604
      %606 = vrot.lane.b32.xlu0 %v563, 126
      %v607 = vpop.permute.xlu0 %606
      %608 = vrot.lane.b32.xlu0 %v564, 126
      %v609 = vpop.permute.xlu0 %608
      %610 = vrot.lane.b32.xlu0 %v565, 126
      %v611 = vpop.permute.xlu0 %610
      %612 = vrot.lane.b32.xlu0 %v566, 126
      %v613 = vpop.permute.xlu0 %612
      %614 = vrot.lane.b32.xlu0 %v567, 126
      %v615 = vpop.permute.xlu0 %614
      %616 = vrot.lane.b32.xlu0 %v568, 126
      %v617 = vpop.permute.xlu0 %616
      %618 = vrot.lane.b32.xlu0 %v569, 126
      %v619 = vpop.permute.xlu0 %618
      %620 = vrot.lane.b32.xlu0 %v570, 126
      %v621 = vpop.permute.xlu0 %620
      %622 = vrot.lane.b32.xlu0 %v571, 126
      %v623 = vpop.permute.xlu0 %622
      %624 = vrot.lane.b32.xlu0 %v572, 126
      %v625 = vpop.permute.xlu0 %624
      %626 = vrot.lane.b32.xlu0 %v573, 126
      %v627 = vpop.permute.xlu0 %626
      %628 = vrot.lane.b32.xlu0 %v574, 126
      %v629 = vpop.permute.xlu0 %628
      %vm630 = vcmask 1031168
      %v631 = vsel %vm630, %v601, %v603
      %v632 = vsel %vm630, %v603, %v605
      %v633 = vsel %vm630, %v607, %v609
      %v634 = vsel %vm630, %v609, %v611
      %v635 = vsel %vm630, %v613, %v615
      %v636 = vsel %vm630, %v615, %v617
      %v637 = vsel %vm630, %v619, %v621
      %v638 = vsel %vm630, %v621, %v623
      %v639 = vsel %vm630, %v625, %v627
      %v640 = vsel %vm630, %v627, %v629
      %v651 = vsel %vm583, %v631, 0.0
      %v652 = vsel %vm584, %v632, 0.0
      %v653 = vsel %vm583, %v633, 0.0
      %v654 = vsel %vm584, %v634, 0.0
      %v655 = vsel %vm583, %v635, 0.0
      %v656 = vsel %vm584, %v636, 0.0
      %v657 = vsel %vm583, %v637, 0.0
      %v658 = vsel %vm584, %v638, 0.0
      %v659 = vsel %vm583, %v639, 0.0
      %v660 = vsel %vm584, %v640, 0.0
      %661 = vst [vmem:[#allocation3 + $0xa0] sm:$0xff] %v651
      %662 = vst [vmem:[#allocation3 + $0xa8] sm:$0xff] %v652
      %663 = vst [vmem:[#allocation3 + $0xb0] sm:$0xff] %v653
      %664 = vst [vmem:[#allocation3 + $0xb8] sm:$0xff] %v654
      %665 = vst [vmem:[#allocation3 + $0xc0] sm:$0xff] %v655
      %666 = vst [vmem:[#allocation3 + $0xc8] sm:$0xff] %v656
      %667 = vst [vmem:[#allocation3 + $0xd0] sm:$0xff] %v657
      %668 = vst [vmem:[#allocation3 + $0xd8] sm:$0xff] %v658
      %669 = vst [vmem:[#allocation3 + $0xe0] sm:$0xff] %v659
      %670 = vst [vmem:[#allocation3 + $0xe8] sm:$0xff] %v660
      %v671 = vld [vmem:[#allocation2] sm:$0xff]
      %v672 = vld [vmem:[#allocation2 + $0x8] sm:$0xff]
      %v673 = vld [vmem:[#allocation2 + $0x10] sm:$0xff]
      %v674 = vld [vmem:[#allocation2 + $0x18] sm:$0xff]
      %v675 = vld [vmem:[#allocation2 + $0x20] sm:$0xff]
      %v676 = vld [vmem:[#allocation2 + $0x28] sm:$0xff]
      %v677 = vld [vmem:[#allocation2 + $0x30] sm:$0xff]
      %v678 = vld [vmem:[#allocation2 + $0x38] sm:$0xff]
      %v679 = vld [vmem:[#allocation2 + $0x40] sm:$0xff]
      %v680 = vld [vmem:[#allocation2 + $0x48] sm:$0xff]
      %v681 = vld [vmem:[#allocation2 + $0x50] sm:$0xff]
      %v682 = vld [vmem:[#allocation2 + $0x58] sm:$0xff]
      %v683 = vld [vmem:[#allocation2 + $0x60] sm:$0xff]
      %v684 = vld [vmem:[#allocation2 + $0x68] sm:$0xff]
      %v685 = vld [vmem:[#allocation2 + $0x70] sm:$0xff]
      %701 = vrot.lane.b32.xlu0 %v671, 112
      %v702 = vpop.permute.xlu0 %701
      %703 = vrot.lane.b32.xlu0 %v672, 112
      %v704 = vpop.permute.xlu0 %703
      %705 = vrot.lane.b32.xlu0 %v673, 112
      %v706 = vpop.permute.xlu0 %705
      %707 = vrot.lane.b32.xlu0 %v674, 112
      %v708 = vpop.permute.xlu0 %707
      %709 = vrot.lane.b32.xlu0 %v675, 112
      %v710 = vpop.permute.xlu0 %709
      %711 = vrot.lane.b32.xlu0 %v676, 112
      %v712 = vpop.permute.xlu0 %711
      %713 = vrot.lane.b32.xlu0 %v677, 112
      %v714 = vpop.permute.xlu0 %713
      %715 = vrot.lane.b32.xlu0 %v678, 112
      %v716 = vpop.permute.xlu0 %715
      %717 = vrot.lane.b32.xlu0 %v679, 112
      %v718 = vpop.permute.xlu0 %717
      %719 = vrot.lane.b32.xlu0 %v680, 112
      %v720 = vpop.permute.xlu0 %719
      %721 = vrot.lane.b32.xlu0 %v681, 112
      %v722 = vpop.permute.xlu0 %721
      %723 = vrot.lane.b32.xlu0 %v682, 112
      %v724 = vpop.permute.xlu0 %723
      %725 = vrot.lane.b32.xlu0 %v683, 112
      %v726 = vpop.permute.xlu0 %725
      %727 = vrot.lane.b32.xlu0 %v684, 112
      %v728 = vpop.permute.xlu0 %727
      %729 = vrot.lane.b32.xlu0 %v685, 112
      %v730 = vpop.permute.xlu0 %729
      %vm731 = vcmask 916480
      %v732 = vsel %vm731, %v702, %v704
      %v733 = vsel %vm731, %v704, %v706
      %v734 = vsel %vm731, %v708, %v710
      %v735 = vsel %vm731, %v710, %v712
      %v736 = vsel %vm731, %v714, %v716
      %v737 = vsel %vm731, %v716, %v718
      %v738 = vsel %vm731, %v720, %v722
      %v739 = vsel %vm731, %v722, %v724
      %v740 = vsel %vm731, %v726, %v728
      %v741 = vsel %vm731, %v728, %v730
      %v752 = vsel %vm447, %v732, 0.0
      %v753 = vsel %vm448, %v733, 0.0
      %v754 = vsel %vm447, %v734, 0.0
      %v755 = vsel %vm448, %v735, 0.0
      %v756 = vsel %vm447, %v736, 0.0
      %v757 = vsel %vm448, %v737, 0.0
      %v758 = vsel %vm447, %v738, 0.0
      %v759 = vsel %vm448, %v739, 0.0
      %v760 = vsel %vm447, %v740, 0.0
      %v761 = vsel %vm448, %v741, 0.0
      %762 = vst [vmem:[#allocation3 + $0xf0] sm:$0xff] %v752
      %763 = vst [vmem:[#allocation3 + $0xf8] sm:$0xff] %v753
      %764 = vst [vmem:[#allocation3 + $0x100] sm:$0xff] %v754
      %765 = vst [vmem:[#allocation3 + $0x108] sm:$0xff] %v755
      %766 = vst [vmem:[#allocation3 + $0x110] sm:$0xff] %v756
      %767 = vst [vmem:[#allocation3 + $0x118] sm:$0xff] %v757
      %768 = vst [vmem:[#allocation3 + $0x120] sm:$0xff] %v758
      %769 = vst [vmem:[#allocation3 + $0x128] sm:$0xff] %v759
      %770 = vst [vmem:[#allocation3 + $0x130] sm:$0xff] %v760
      %771 = vst [vmem:[#allocation3 + $0x138] sm:$0xff] %v761
      %v772 = vld [vmem:[#allocation2] sm:$0xff]
      %v773 = vld [vmem:[#allocation2 + $0x8] sm:$0xff]
      %v774 = vld [vmem:[#allocation2 + $0x10] sm:$0xff]
      %v775 = vld [vmem:[#allocation2 + $0x18] sm:$0xff]
      %v776 = vld [vmem:[#allocation2 + $0x20] sm:$0xff]
      %v777 = vld [vmem:[#allocation2 + $0x28] sm:$0xff]
      %v778 = vld [vmem:[#allocation2 + $0x30] sm:$0xff]
      %v779 = vld [vmem:[#allocation2 + $0x38] sm:$0xff]
      %v780 = vld [vmem:[#allocation2 + $0x40] sm:$0xff]
      %v781 = vld [vmem:[#allocation2 + $0x48] sm:$0xff]
      %v782 = vld [vmem:[#allocation2 + $0x50] sm:$0xff]
      %v783 = vld [vmem:[#allocation2 + $0x58] sm:$0xff]
      %v784 = vld [vmem:[#allocation2 + $0x60] sm:$0xff]
      %v785 = vld [vmem:[#allocation2 + $0x68] sm:$0xff]
      %v786 = vld [vmem:[#allocation2 + $0x70] sm:$0xff]
      %802 = vrot.lane.b32.xlu0 %v772, 111
      %v803 = vpop.permute.xlu0 %802
      %804 = vrot.lane.b32.xlu0 %v773, 111
      %v805 = vpop.permute.xlu0 %804
      %806 = vrot.lane.b32.xlu0 %v774, 111
      %v807 = vpop.permute.xlu0 %806
      %808 = vrot.lane.b32.xlu0 %v775, 111
      %v809 = vpop.permute.xlu0 %808
      %810 = vrot.lane.b32.xlu0 %v776, 111
      %v811 = vpop.permute.xlu0 %810
      %812 = vrot.lane.b32.xlu0 %v777, 111
      %v813 = vpop.permute.xlu0 %812
      %814 = vrot.lane.b32.xlu0 %v778, 111
      %v815 = vpop.permute.xlu0 %814
      %816 = vrot.lane.b32.xlu0 %v779, 111
      %v817 = vpop.permute.xlu0 %816
      %818 = vrot.lane.b32.xlu0 %v780, 111
      %v819 = vpop.permute.xlu0 %818
      %820 = vrot.lane.b32.xlu0 %v781, 111
      %v821 = vpop.permute.xlu0 %820
      %822 = vrot.lane.b32.xlu0 %v782, 111
      %v823 = vpop.permute.xlu0 %822
      %824 = vrot.lane.b32.xlu0 %v783, 111
      %v825 = vpop.permute.xlu0 %824
      %826 = vrot.lane.b32.xlu0 %v784, 111
      %v827 = vpop.permute.xlu0 %826
      %828 = vrot.lane.b32.xlu0 %v785, 111
      %v829 = vpop.permute.xlu0 %828
      %830 = vrot.lane.b32.xlu0 %v786, 111
      %v831 = vpop.permute.xlu0 %830
      %vm832 = vcmask 908288
      %v833 = vsel %vm832, %v803, %v805
      %v834 = vsel %vm832, %v805, %v807
      %v835 = vsel %vm832, %v809, %v811
      %v836 = vsel %vm832, %v811, %v813
      %v837 = vsel %vm832, %v815, %v817
      %v838 = vsel %vm832, %v817, %v819
      %v839 = vsel %vm832, %v821, %v823
      %v840 = vsel %vm832, %v823, %v825
      %v841 = vsel %vm832, %v827, %v829
      %v842 = vsel %vm832, %v829, %v831
      %853 = vst [vmem:[#allocation3 + $0x140] sm:$0xff] %v833
      %854 = vst [vmem:[#allocation3 + $0x148] sm:$0xff] %v834
      %855 = vst [vmem:[#allocation3 + $0x150] sm:$0xff] %v835
      %856 = vst [vmem:[#allocation3 + $0x158] sm:$0xff] %v836
      %857 = vst [vmem:[#allocation3 + $0x160] sm:$0xff] %v837
      %858 = vst [vmem:[#allocation3 + $0x168] sm:$0xff] %v838
      %859 = vst [vmem:[#allocation3 + $0x170] sm:$0xff] %v839
      %860 = vst [vmem:[#allocation3 + $0x178] sm:$0xff] %v840
      %861 = vst [vmem:[#allocation3 + $0x180] sm:$0xff] %v841
      %862 = vst [vmem:[#allocation3 + $0x188] sm:$0xff] %v842
      %v863 = vld [vmem:[#allocation2] sm:$0xff]
      %v864 = vld [vmem:[#allocation2 + $0x8] sm:$0xff]
      %v865 = vld [vmem:[#allocation2 + $0x10] sm:$0xff]
      %v866 = vld [vmem:[#allocation2 + $0x18] sm:$0xff]
      %v867 = vld [vmem:[#allocation2 + $0x20] sm:$0xff]
      %v868 = vld [vmem:[#allocation2 + $0x28] sm:$0xff]
      %v869 = vld [vmem:[#allocation2 + $0x30] sm:$0xff]
      %v870 = vld [vmem:[#allocation2 + $0x38] sm:$0xff]
      %v871 = vld [vmem:[#allocation2 + $0x40] sm:$0xff]
      %v872 = vld [vmem:[#allocation2 + $0x48] sm:$0xff]
      %v873 = vld [vmem:[#allocation2 + $0x50] sm:$0xff]
      %v874 = vld [vmem:[#allocation2 + $0x58] sm:$0xff]
      %v875 = vld [vmem:[#allocation2 + $0x60] sm:$0xff]
      %v876 = vld [vmem:[#allocation2 + $0x68] sm:$0xff]
      %v877 = vld [vmem:[#allocation2 + $0x70] sm:$0xff]
      %893 = vrot.lane.b32.xlu0 %v863, 110
      %v894 = vpop.permute.xlu0 %893
      %895 = vrot.lane.b32.xlu0 %v864, 110
      %v896 = vpop.permute.xlu0 %895
      %897 = vrot.lane.b32.xlu0 %v865, 110
      %v898 = vpop.permute.xlu0 %897
      %899 = vrot.lane.b32.xlu0 %v866, 110
      %v900 = vpop.permute.xlu0 %899
      %901 = vrot.lane.b32.xlu0 %v867, 110
      %v902 = vpop.permute.xlu0 %901
      %903 = vrot.lane.b32.xlu0 %v868, 110
      %v904 = vpop.permute.xlu0 %903
      %905 = vrot.lane.b32.xlu0 %v869, 110
      %v906 = vpop.permute.xlu0 %905
      %907 = vrot.lane.b32.xlu0 %v870, 110
      %v908 = vpop.permute.xlu0 %907
      %909 = vrot.lane.b32.xlu0 %v871, 110
      %v910 = vpop.permute.xlu0 %909
      %911 = vrot.lane.b32.xlu0 %v872, 110
      %v912 = vpop.permute.xlu0 %911
      %913 = vrot.lane.b32.xlu0 %v873, 110
      %v914 = vpop.permute.xlu0 %913
      %915 = vrot.lane.b32.xlu0 %v874, 110
      %v916 = vpop.permute.xlu0 %915
      %917 = vrot.lane.b32.xlu0 %v875, 110
      %v918 = vpop.permute.xlu0 %917
      %919 = vrot.lane.b32.xlu0 %v876, 110
      %v920 = vpop.permute.xlu0 %919
      %921 = vrot.lane.b32.xlu0 %v877, 110
      %v922 = vpop.permute.xlu0 %921
      %vm923 = vcmask 900096
      %v924 = vsel %vm923, %v894, %v896
      %v925 = vsel %vm923, %v896, %v898
      %v926 = vsel %vm923, %v900, %v902
      %v927 = vsel %vm923, %v902, %v904
      %v928 = vsel %vm923, %v906, %v908
      %v929 = vsel %vm923, %v908, %v910
      %v930 = vsel %vm923, %v912, %v914
      %v931 = vsel %vm923, %v914, %v916
      %v932 = vsel %vm923, %v918, %v920
      %v933 = vsel %vm923, %v920, %v922
      %v944 = vsel %vm583, %v924, 0.0
      %v945 = vsel %vm584, %v925, 0.0
      %v946 = vsel %vm583, %v926, 0.0
      %v947 = vsel %vm584, %v927, 0.0
      %v948 = vsel %vm583, %v928, 0.0
      %v949 = vsel %vm584, %v929, 0.0
      %v950 = vsel %vm583, %v930, 0.0
      %v951 = vsel %vm584, %v931, 0.0
      %v952 = vsel %vm583, %v932, 0.0
      %v953 = vsel %vm584, %v933, 0.0
      %954 = vst [vmem:[#allocation3 + $0x190] sm:$0xff] %v944
      %955 = vst [vmem:[#allocation3 + $0x198] sm:$0xff] %v945
      %956 = vst [vmem:[#allocation3 + $0x1a0] sm:$0xff] %v946
      %957 = vst [vmem:[#allocation3 + $0x1a8] sm:$0xff] %v947
      %958 = vst [vmem:[#allocation3 + $0x1b0] sm:$0xff] %v948
      %959 = vst [vmem:[#allocation3 + $0x1b8] sm:$0xff] %v949
      %960 = vst [vmem:[#allocation3 + $0x1c0] sm:$0xff] %v950
      %961 = vst [vmem:[#allocation3 + $0x1c8] sm:$0xff] %v951
      %962 = vst [vmem:[#allocation3 + $0x1d0] sm:$0xff] %v952
      %963 = vst [vmem:[#allocation3 + $0x1d8] sm:$0xff] %v953
      %v964 = vld [vmem:[#allocation2] sm:$0xff]
      %v965 = vld [vmem:[#allocation2 + $0x8] sm:$0xff]
      %v966 = vld [vmem:[#allocation2 + $0x10] sm:$0xff]
      %v967 = vld [vmem:[#allocation2 + $0x18] sm:$0xff]
      %v968 = vld [vmem:[#allocation2 + $0x20] sm:$0xff]
      %v969 = vld [vmem:[#allocation2 + $0x28] sm:$0xff]
      %v970 = vld [vmem:[#allocation2 + $0x30] sm:$0xff]
      %v971 = vld [vmem:[#allocation2 + $0x38] sm:$0xff]
      %v972 = vld [vmem:[#allocation2 + $0x40] sm:$0xff]
      %v973 = vld [vmem:[#allocation2 + $0x48] sm:$0xff]
      %v974 = vld [vmem:[#allocation2 + $0x50] sm:$0xff]
      %v975 = vld [vmem:[#allocation2 + $0x58] sm:$0xff]
      %v976 = vld [vmem:[#allocation2 + $0x60] sm:$0xff]
      %v977 = vld [vmem:[#allocation2 + $0x68] sm:$0xff]
      %v978 = vld [vmem:[#allocation2 + $0x70] sm:$0xff]
      %994 = vrot.lane.b32.xlu0 %v964, 96
      %v995 = vpop.permute.xlu0 %994
      %996 = vrot.lane.b32.xlu0 %v965, 96
      %v997 = vpop.permute.xlu0 %996
      %998 = vrot.lane.b32.xlu0 %v966, 96
      %v999 = vpop.permute.xlu0 %998
      %1000 = vrot.lane.b32.xlu0 %v967, 96
      %v1001 = vpop.permute.xlu0 %1000
      %1002 = vrot.lane.b32.xlu0 %v968, 96
      %v1003 = vpop.permute.xlu0 %1002
      %1004 = vrot.lane.b32.xlu0 %v969, 96
      %v1005 = vpop.permute.xlu0 %1004
      %1006 = vrot.lane.b32.xlu0 %v970, 96
      %v1007 = vpop.permute.xlu0 %1006
      %1008 = vrot.lane.b32.xlu0 %v971, 96
      %v1009 = vpop.permute.xlu0 %1008
      %1010 = vrot.lane.b32.xlu0 %v972, 96
      %v1011 = vpop.permute.xlu0 %1010
      %1012 = vrot.lane.b32.xlu0 %v973, 96
      %v1013 = vpop.permute.xlu0 %1012
      %1014 = vrot.lane.b32.xlu0 %v974, 96
      %v1015 = vpop.permute.xlu0 %1014
      %1016 = vrot.lane.b32.xlu0 %v975, 96
      %v1017 = vpop.permute.xlu0 %1016
      %1018 = vrot.lane.b32.xlu0 %v976, 96
      %v1019 = vpop.permute.xlu0 %1018
      %1020 = vrot.lane.b32.xlu0 %v977, 96
      %v1021 = vpop.permute.xlu0 %1020
      %1022 = vrot.lane.b32.xlu0 %v978, 96
      %v1023 = vpop.permute.xlu0 %1022
      %vm1024 = vcmask 785408
      %v1025 = vsel %vm1024, %v995, %v997
      %v1026 = vsel %vm1024, %v997, %v999
      %v1027 = vsel %vm1024, %v1001, %v1003
      %v1028 = vsel %vm1024, %v1003, %v1005
      %v1029 = vsel %vm1024, %v1007, %v1009
      %v1030 = vsel %vm1024, %v1009, %v1011
      %v1031 = vsel %vm1024, %v1013, %v1015
      %v1032 = vsel %vm1024, %v1015, %v1017
      %v1033 = vsel %vm1024, %v1019, %v1021
      %v1034 = vsel %vm1024, %v1021, %v1023
      %v1045 = vsel %vm447, %v1025, 0.0
      %v1046 = vsel %vm448, %v1026, 0.0
      %v1047 = vsel %vm447, %v1027, 0.0
      %v1048 = vsel %vm448, %v1028, 0.0
      %v1049 = vsel %vm447, %v1029, 0.0
      %v1050 = vsel %vm448, %v1030, 0.0
      %v1051 = vsel %vm447, %v1031, 0.0
      %v1052 = vsel %vm448, %v1032, 0.0
      %v1053 = vsel %vm447, %v1033, 0.0
      %v1054 = vsel %vm448, %v1034, 0.0
      %1055 = vst [vmem:[#allocation3 + $0x1e0] sm:$0xff] %v1045
      %1056 = vst [vmem:[#allocation3 + $0x1e8] sm:$0xff] %v1046
      %1057 = vst [vmem:[#allocation3 + $0x1f0] sm:$0xff] %v1047
      %1058 = vst [vmem:[#allocation3 + $0x1f8] sm:$0xff] %v1048
      %1059 = vst [vmem:[#allocation3 + $0x200] sm:$0xff] %v1049
      %1060 = vst [vmem:[#allocation3 + $0x208] sm:$0xff] %v1050
      %1061 = vst [vmem:[#allocation3 + $0x210] sm:$0xff] %v1051
      %1062 = vst [vmem:[#allocation3 + $0x218] sm:$0xff] %v1052
      %1063 = vst [vmem:[#allocation3 + $0x220] sm:$0xff] %v1053
      %1064 = vst [vmem:[#allocation3 + $0x228] sm:$0xff] %v1054
      %v1065 = vld [vmem:[#allocation2] sm:$0xff]
      %v1066 = vld [vmem:[#allocation2 + $0x8] sm:$0xff]
      %v1067 = vld [vmem:[#allocation2 + $0x10] sm:$0xff]
      %v1068 = vld [vmem:[#allocation2 + $0x18] sm:$0xff]
      %v1069 = vld [vmem:[#allocation2 + $0x20] sm:$0xff]
      %v1070 = vld [vmem:[#allocation2 + $0x28] sm:$0xff]
      %v1071 = vld [vmem:[#allocation2 + $0x30] sm:$0xff]
      %v1072 = vld [vmem:[#allocation2 + $0x38] sm:$0xff]
      %v1073 = vld [vmem:[#allocation2 + $0x40] sm:$0xff]
      %v1074 = vld [vmem:[#allocation2 + $0x48] sm:$0xff]
      %v1075 = vld [vmem:[#allocation2 + $0x50] sm:$0xff]
      %v1076 = vld [vmem:[#allocation2 + $0x58] sm:$0xff]
      %v1077 = vld [vmem:[#allocation2 + $0x60] sm:$0xff]
      %v1078 = vld [vmem:[#allocation2 + $0x68] sm:$0xff]
      %v1079 = vld [vmem:[#allocation2 + $0x70] sm:$0xff]
      %1095 = vrot.lane.b32.xlu0 %v1065, 95
      %v1096 = vpop.permute.xlu0 %1095
      %1097 = vrot.lane.b32.xlu0 %v1066, 95
      %v1098 = vpop.permute.xlu0 %1097
      %1099 = vrot.lane.b32.xlu0 %v1067, 95
      %v1100 = vpop.permute.xlu0 %1099
      %1101 = vrot.lane.b32.xlu0 %v1068, 95
      %v1102 = vpop.permute.xlu0 %1101
      %1103 = vrot.lane.b32.xlu0 %v1069, 95
      %v1104 = vpop.permute.xlu0 %1103
      %1105 = vrot.lane.b32.xlu0 %v1070, 95
      %v1106 = vpop.permute.xlu0 %1105
      %1107 = vrot.lane.b32.xlu0 %v1071, 95
      %v1108 = vpop.permute.xlu0 %1107
      %1109 = vrot.lane.b32.xlu0 %v1072, 95
      %v1110 = vpop.permute.xlu0 %1109
      %1111 = vrot.lane.b32.xlu0 %v1073, 95
      %v1112 = vpop.permute.xlu0 %1111
      %1113 = vrot.lane.b32.xlu0 %v1074, 95
      %v1114 = vpop.permute.xlu0 %1113
      %1115 = vrot.lane.b32.xlu0 %v1075, 95
      %v1116 = vpop.permute.xlu0 %1115
      %1117 = vrot.lane.b32.xlu0 %v1076, 95
      %v1118 = vpop.permute.xlu0 %1117
      %1119 = vrot.lane.b32.xlu0 %v1077, 95
      %v1120 = vpop.permute.xlu0 %1119
      %1121 = vrot.lane.b32.xlu0 %v1078, 95
      %v1122 = vpop.permute.xlu0 %1121
      %1123 = vrot.lane.b32.xlu0 %v1079, 95
      %v1124 = vpop.permute.xlu0 %1123
      %vm1125 = vcmask 777216
      %v1126 = vsel %vm1125, %v1096, %v1098
      %v1127 = vsel %vm1125, %v1098, %v1100
      %v1128 = vsel %vm1125, %v1102, %v1104
      %v1129 = vsel %vm1125, %v1104, %v1106
      %v1130 = vsel %vm1125, %v1108, %v1110
      %v1131 = vsel %vm1125, %v1110, %v1112
      %v1132 = vsel %vm1125, %v1114, %v1116
      %v1133 = vsel %vm1125, %v1116, %v1118
      %v1134 = vsel %vm1125, %v1120, %v1122
      %v1135 = vsel %vm1125, %v1122, %v1124
      %1146 = vst [vmem:[#allocation3 + $0x230] sm:$0xff] %v1126
      %1147 = vst [vmem:[#allocation3 + $0x238] sm:$0xff] %v1127
      %1148 = vst [vmem:[#allocation3 + $0x240] sm:$0xff] %v1128
      %1149 = vst [vmem:[#allocation3 + $0x248] sm:$0xff] %v1129
      %1150 = vst [vmem:[#allocation3 + $0x250] sm:$0xff] %v1130
      %1151 = vst [vmem:[#allocation3 + $0x258] sm:$0xff] %v1131
      %1152 = vst [vmem:[#allocation3 + $0x260] sm:$0xff] %v1132
      %1153 = vst [vmem:[#allocation3 + $0x268] sm:$0xff] %v1133
      %1154 = vst [vmem:[#allocation3 + $0x270] sm:$0xff] %v1134
      %1155 = vst [vmem:[#allocation3 + $0x278] sm:$0xff] %v1135
      %v1156 = vld [vmem:[#allocation2] sm:$0xff]
      %v1157 = vld [vmem:[#allocation2 + $0x8] sm:$0xff]
      %v1158 = vld [vmem:[#allocation2 + $0x10] sm:$0xff]
      %v1159 = vld [vmem:[#allocation2 + $0x18] sm:$0xff]
      %v1160 = vld [vmem:[#allocation2 + $0x20] sm:$0xff]
      %v1161 = vld [vmem:[#allocation2 + $0x28] sm:$0xff]
      %v1162 = vld [vmem:[#allocation2 + $0x30] sm:$0xff]
      %v1163 = vld [vmem:[#allocation2 + $0x38] sm:$0xff]
      %v1164 = vld [vmem:[#allocation2 + $0x40] sm:$0xff]
      %v1165 = vld [vmem:[#allocation2 + $0x48] sm:$0xff]
      %v1166 = vld [vmem:[#allocation2 + $0x50] sm:$0xff]
      %v1167 = vld [vmem:[#allocation2 + $0x58] sm:$0xff]
      %v1168 = vld [vmem:[#allocation2 + $0x60] sm:$0xff]
      %v1169 = vld [vmem:[#allocation2 + $0x68] sm:$0xff]
      %v1170 = vld [vmem:[#allocation2 + $0x70] sm:$0xff]
      %1186 = vrot.lane.b32.xlu0 %v1156, 94
      %v1187 = vpop.permute.xlu0 %1186
      %1188 = vrot.lane.b32.xlu0 %v1157, 94
      %v1189 = vpop.permute.xlu0 %1188
      %1190 = vrot.lane.b32.xlu0 %v1158, 94
      %v1191 = vpop.permute.xlu0 %1190
      %1192 = vrot.lane.b32.xlu0 %v1159, 94
      %v1193 = vpop.permute.xlu0 %1192
      %1194 = vrot.lane.b32.xlu0 %v1160, 94
      %v1195 = vpop.permute.xlu0 %1194
      %1196 = vrot.lane.b32.xlu0 %v1161, 94
      %v1197 = vpop.permute.xlu0 %1196
      %1198 = vrot.lane.b32.xlu0 %v1162, 94
      %v1199 = vpop.permute.xlu0 %1198
      %1200 = vrot.lane.b32.xlu0 %v1163, 94
      %v1201 = vpop.permute.xlu0 %1200
      %1202 = vrot.lane.b32.xlu0 %v1164, 94
      %v1203 = vpop.permute.xlu0 %1202
      %1204 = vrot.lane.b32.xlu0 %v1165, 94
      %v1205 = vpop.permute.xlu0 %1204
      %1206 = vrot.lane.b32.xlu0 %v1166, 94
      %v1207 = vpop.permute.xlu0 %1206
      %1208 = vrot.lane.b32.xlu0 %v1167, 94
      %v1209 = vpop.permute.xlu0 %1208
      %1210 = vrot.lane.b32.xlu0 %v1168, 94
      %v1211 = vpop.permute.xlu0 %1210
      %1212 = vrot.lane.b32.xlu0 %v1169, 94
      %v1213 = vpop.permute.xlu0 %1212
      %1214 = vrot.lane.b32.xlu0 %v1170, 94
      %v1215 = vpop.permute.xlu0 %1214
      %vm1216 = vcmask 769024
      %v1217 = vsel %vm1216, %v1187, %v1189
      %v1218 = vsel %vm1216, %v1189, %v1191
      %v1219 = vsel %vm1216, %v1193, %v1195
      %v1220 = vsel %vm1216, %v1195, %v1197
      %v1221 = vsel %vm1216, %v1199, %v1201
      %v1222 = vsel %vm1216, %v1201, %v1203
      %v1223 = vsel %vm1216, %v1205, %v1207
      %v1224 = vsel %vm1216, %v1207, %v1209
      %v1225 = vsel %vm1216, %v1211, %v1213
      %v1226 = vsel %vm1216, %v1213, %v1215
      %v1237 = vsel %vm583, %v1217, 0.0
      %v1238 = vsel %vm584, %v1218, 0.0
      %v1239 = vsel %vm583, %v1219, 0.0
      %v1240 = vsel %vm584, %v1220, 0.0
      %v1241 = vsel %vm583, %v1221, 0.0
      %v1242 = vsel %vm584, %v1222, 0.0
      %v1243 = vsel %vm583, %v1223, 0.0
      %v1244 = vsel %vm584, %v1224, 0.0
      %v1245 = vsel %vm583, %v1225, 0.0
      %v1246 = vsel %vm584, %v1226, 0.0
      %1247 = vst [vmem:[#allocation3 + $0x280] sm:$0xff] %v1237
      %1248 = vst [vmem:[#allocation3 + $0x288] sm:$0xff] %v1238
      %1249 = vst [vmem:[#allocation3 + $0x290] sm:$0xff] %v1239
      %1250 = vst [vmem:[#allocation3 + $0x298] sm:$0xff] %v1240
      %1251 = vst [vmem:[#allocation3 + $0x2a0] sm:$0xff] %v1241
      %1252 = vst [vmem:[#allocation3 + $0x2a8] sm:$0xff] %v1242
      %1253 = vst [vmem:[#allocation3 + $0x2b0] sm:$0xff] %v1243
      %1254 = vst [vmem:[#allocation3 + $0x2b8] sm:$0xff] %v1244
      %1255 = vst [vmem:[#allocation3 + $0x2c0] sm:$0xff] %v1245
      %1256 = vst [vmem:[#allocation3 + $0x2c8] sm:$0xff] %v1246
      %v1257 = vlaneseq
      %vm1258 = vcmp.ge.s32.totalorder %v1257, 0
      %vm1259 = vcmp.lt.s32.totalorder %v1257, 256
      %vm1260 = vmand %vm1258, %vm1259
      %s1261 = scalar_lea.vmem [#allocation3], 720
      %1262 = vst.msk [vmem:[%s1261] ss:$8 sm:$0x3] %vm1260, 1.0
      %1263 = vst.msk [vmem:[%s1261] ss:$8 sm:$0x0] %vm1260, 1.0
      %v1264 = vld [vmem:[%s3] sm:$0xff]
      %v1265 = vld [vmem:[%s3 + $0x8] sm:$0xff]
      %v1266 = vld [vmem:[%s3 + $0x10] sm:$0xff]
      %v1267 = vld [vmem:[%s3 + $0x18] sm:$0xff]
      %v1268 = vld [vmem:[%s3 + $0x20] sm:$0xff]
      %v1269 = vld [vmem:[%s3 + $0x28] sm:$0xff]
      %v1270 = vld [vmem:[%s3 + $0x30] sm:$0xff]
      %v1271 = vld [vmem:[%s3 + $0x38] sm:$0xff]
      %v1272 = vld [vmem:[%s3 + $0x40] sm:$0xff]
      %v1273 = vld [vmem:[%s3 + $0x48] sm:$0xff]
      %v1274 = vld [vmem:[%s3 + $0x50] sm:$0xff]
      %v1275 = vld [vmem:[%s3 + $0x58] sm:$0xff]
      %v1276 = vld [vmem:[%s3 + $0x60] sm:$0xff]
      %v1277 = vld [vmem:[%s3 + $0x68] sm:$0xff]
      %v1278 = vld [vmem:[%s3 + $0x70] sm:$0xff]
      %v1279 = vld [vmem:[%s3 + $0x78] sm:$0xff]
      %v1280 = vld [vmem:[%s3 + $0x80] sm:$0xff]
      %v1281 = vld [vmem:[%s3 + $0x88] sm:$0xff]
      %v1282 = vld [vmem:[%s3 + $0x90] sm:$0xff]
      %v1283 = vld [vmem:[%s3 + $0x98] sm:$0xff]
      %v1284 = vld [vmem:[%s3 + $0xa0] sm:$0xff]
      %v1285 = vld [vmem:[%s3 + $0xa8] sm:$0xff]
      %v1286 = vld [vmem:[%s3 + $0xb0] sm:$0xff]
      %v1287 = vld [vmem:[%s3 + $0xb8] sm:$0xff]
      %v1288 = vld [vmem:[%s3 + $0xc0] sm:$0xff]
      %v1289 = vld [vmem:[%s3 + $0xc8] sm:$0xff]
      %v1290 = vld [vmem:[%s3 + $0xd0] sm:$0xff]
      %v1291 = vld [vmem:[%s3 + $0xd8] sm:$0xff]
      %v1292 = vld [vmem:[%s3 + $0xe0] sm:$0xff]
      %v1293 = vld [vmem:[%s3 + $0xe8] sm:$0xff]
      %v1294 = vld [vmem:[%s3 + $0xf0] sm:$0xff]
      %v1295 = vld [vmem:[%s3 + $0xf8] sm:$0xff]
      %v1296 = vld [vmem:[%s3 + $0x100] sm:$0xff]
      %v1297 = vld [vmem:[%s3 + $0x108] sm:$0xff]
      %v1298 = vld [vmem:[%s3 + $0x110] sm:$0xff]
      %v1299 = vld [vmem:[%s3 + $0x118] sm:$0xff]
      %v1300 = vld [vmem:[%s3 + $0x120] sm:$0xff]
      %v1301 = vld [vmem:[%s3 + $0x128] sm:$0xff]
      %v1302 = vld [vmem:[%s3 + $0x130] sm:$0xff]
      %v1303 = vld [vmem:[%s3 + $0x138] sm:$0xff]
      %v1304 = vld [vmem:[%s3 + $0x140] sm:$0xff]
      %v1305 = vld [vmem:[%s3 + $0x148] sm:$0xff]
      %v1306 = vld [vmem:[%s3 + $0x150] sm:$0xff]
      %v1307 = vld [vmem:[%s3 + $0x158] sm:$0xff]
      %v1308 = vld [vmem:[%s3 + $0x160] sm:$0xff]
      %v1309 = vld [vmem:[%s3 + $0x168] sm:$0xff]
      %v1310 = vld [vmem:[%s3 + $0x170] sm:$0xff]
      %v1311 = vld [vmem:[%s3 + $0x178] sm:$0xff]
      %v1312 = vld [vmem:[#allocation3] sm:$0xff]
      %v1313 = vld [vmem:[#allocation3 + $0x8] sm:$0xff]
      %v1314 = vld [vmem:[#allocation3 + $0x10] sm:$0xff]
      %v1315 = vld [vmem:[#allocation3 + $0x18] sm:$0xff]
      %v1316 = vld [vmem:[#allocation3 + $0x20] sm:$0xff]
      %v1317 = vld [vmem:[#allocation3 + $0x28] sm:$0xff]
      %v1318 = vld [vmem:[#allocation3 + $0x30] sm:$0xff]
      %v1319 = vld [vmem:[#allocation3 + $0x38] sm:$0xff]
      %v1320 = vld [vmem:[#allocation3 + $0x40] sm:$0xff]
      %v1321 = vld [vmem:[#allocation3 + $0x48] sm:$0xff]
      %v1322 = vld [vmem:[#allocation3 + $0x50] sm:$0xff]
      %v1323 = vld [vmem:[#allocation3 + $0x58] sm:$0xff]
      %v1324 = vld [vmem:[#allocation3 + $0x60] sm:$0xff]
      %v1325 = vld [vmem:[#allocation3 + $0x68] sm:$0xff]
      %v1326 = vld [vmem:[#allocation3 + $0x70] sm:$0xff]
      %v1327 = vld [vmem:[#allocation3 + $0x78] sm:$0xff]
      %v1328 = vld [vmem:[#allocation3 + $0x80] sm:$0xff]
      %v1329 = vld [vmem:[#allocation3 + $0x88] sm:$0xff]
      %v1330 = vld [vmem:[#allocation3 + $0x90] sm:$0xff]
      %v1331 = vld [vmem:[#allocation3 + $0x98] sm:$0xff]
      %v1332 = vld [vmem:[#allocation3 + $0xa0] sm:$0xff]
      %v1333 = vld [vmem:[#allocation3 + $0xa8] sm:$0xff]
      %v1334 = vld [vmem:[#allocation3 + $0xb0] sm:$0xff]
      %v1335 = vld [vmem:[#allocation3 + $0xb8] sm:$0xff]
      %v1336 = vld [vmem:[#allocation3 + $0xc0] sm:$0xff]
      %v1337 = vld [vmem:[#allocation3 + $0xc8] sm:$0xff]
      %v1338 = vld [vmem:[#allocation3 + $0xd0] sm:$0xff]
      %v1339 = vld [vmem:[#allocation3 + $0xd8] sm:$0xff]
      %v1340 = vld [vmem:[#allocation3 + $0xe0] sm:$0xff]
      %v1341 = vld [vmem:[#allocation3 + $0xe8] sm:$0xff]
      %v1342 = vld [vmem:[#allocation3 + $0xf0] sm:$0xff]
      %v1343 = vld [vmem:[#allocation3 + $0xf8] sm:$0xff]
      %v1344 = vld [vmem:[#allocation3 + $0x100] sm:$0xff]
      %v1345 = vld [vmem:[#allocation3 + $0x108] sm:$0xff]
      %v1346 = vld [vmem:[#allocation3 + $0x110] sm:$0xff]
      %v1347 = vld [vmem:[#allocation3 + $0x118] sm:$0xff]
      %v1348 = vld [vmem:[#allocation3 + $0x120] sm:$0xff]
      %v1349 = vld [vmem:[#allocation3 + $0x128] sm:$0xff]
      %v1350 = vld [vmem:[#allocation3 + $0x130] sm:$0xff]
      %v1351 = vld [vmem:[#allocation3 + $0x138] sm:$0xff]
      %v1352 = vld [vmem:[#allocation3 + $0x140] sm:$0xff]
      %v1353 = vld [vmem:[#allocation3 + $0x148] sm:$0xff]
      %v1354 = vld [vmem:[#allocation3 + $0x150] sm:$0xff]
      %v1355 = vld [vmem:[#allocation3 + $0x158] sm:$0xff]
      %v1356 = vld [vmem:[#allocation3 + $0x160] sm:$0xff]
      %v1357 = vld [vmem:[#allocation3 + $0x168] sm:$0xff]
      %v1358 = vld [vmem:[#allocation3 + $0x170] sm:$0xff]
      %v1359 = vld [vmem:[#allocation3 + $0x178] sm:$0xff]
      %v1360 = vld [vmem:[#allocation3 + $0x180] sm:$0xff]
      %v1361 = vld [vmem:[#allocation3 + $0x188] sm:$0xff]
      %v1362 = vld [vmem:[#allocation3 + $0x190] sm:$0xff]
      %v1363 = vld [vmem:[#allocation3 + $0x198] sm:$0xff]
      %v1364 = vld [vmem:[#allocation3 + $0x1a0] sm:$0xff]
      %v1365 = vld [vmem:[#allocation3 + $0x1a8] sm:$0xff]
      %v1366 = vld [vmem:[#allocation3 + $0x1b0] sm:$0xff]
      %v1367 = vld [vmem:[#allocation3 + $0x1b8] sm:$0xff]
      %v1368 = vld [vmem:[#allocation3 + $0x1c0] sm:$0xff]
      %v1369 = vld [vmem:[#allocation3 + $0x1c8] sm:$0xff]
      %v1370 = vld [vmem:[#allocation3 + $0x1d0] sm:$0xff]
      %v1371 = vld [vmem:[#allocation3 + $0x1d8] sm:$0xff]
      %v1372 = vld [vmem:[#allocation3 + $0x1e0] sm:$0xff]
      %v1373 = vld [vmem:[#allocation3 + $0x1e8] sm:$0xff]
      %v1374 = vld [vmem:[#allocation3 + $0x1f0] sm:$0xff]
      %v1375 = vld [vmem:[#allocation3 + $0x1f8] sm:$0xff]
      %v1376 = vld [vmem:[#allocation3 + $0x200] sm:$0xff]
      %v1377 = vld [vmem:[#allocation3 + $0x208] sm:$0xff]
      %v1378 = vld [vmem:[#allocation3 + $0x210] sm:$0xff]
      %v1379 = vld [vmem:[#allocation3 + $0x218] sm:$0xff]
      %v1380 = vld [vmem:[#allocation3 + $0x220] sm:$0xff]
      %v1381 = vld [vmem:[#allocation3 + $0x228] sm:$0xff]
      %v1382 = vld [vmem:[#allocation3 + $0x230] sm:$0xff]
      %v1383 = vld [vmem:[#allocation3 + $0x238] sm:$0xff]
      %v1384 = vld [vmem:[#allocation3 + $0x240] sm:$0xff]
      %v1385 = vld [vmem:[#allocation3 + $0x248] sm:$0xff]
      %v1386 = vld [vmem:[#allocation3 + $0x250] sm:$0xff]
      %v1387 = vld [vmem:[#allocation3 + $0x258] sm:$0xff]
      %v1388 = vld [vmem:[#allocation3 + $0x260] sm:$0xff]
      %v1389 = vld [vmem:[#allocation3 + $0x268] sm:$0xff]
      %v1390 = vld [vmem:[#allocation3 + $0x270] sm:$0xff]
      %v1391 = vld [vmem:[#allocation3 + $0x278] sm:$0xff]
      %v1392 = vld [vmem:[#allocation3 + $0x280] sm:$0xff]
      %v1393 = vld [vmem:[#allocation3 + $0x288] sm:$0xff]
      %v1394 = vld [vmem:[#allocation3 + $0x290] sm:$0xff]
      %v1395 = vld [vmem:[#allocation3 + $0x298] sm:$0xff]
      %v1396 = vld [vmem:[#allocation3 + $0x2a0] sm:$0xff]
      %v1397 = vld [vmem:[#allocation3 + $0x2a8] sm:$0xff]
      %v1398 = vld [vmem:[#allocation3 + $0x2b0] sm:$0xff]
      %v1399 = vld [vmem:[#allocation3 + $0x2b8] sm:$0xff]
      %v1400 = vld [vmem:[#allocation3 + $0x2c0] sm:$0xff]
      %v1401 = vld [vmem:[#allocation3 + $0x2c8] sm:$0xff]
      %v1402 = vld [vmem:[#allocation3 + $0x2d0] sm:$0x1]
      %v1403 = vld [vmem:[#allocation3 + $0x2d8] sm:$0x1]
      %vm1404 = vcmask 859136
      %v1406 = vsel %vm1404, %v1266, 0
      %v1409 = vsel %vm1404, %v1269, 0
      %v1412 = vsel %vm1404, %v1272, 0
      %v1415 = vsel %vm1404, %v1275, 0
      %v1418 = vsel %vm1404, %v1278, 0
      %v1421 = vsel %vm1404, %v1281, 0
      %v1424 = vsel %vm1404, %v1284, 0
      %v1427 = vsel %vm1404, %v1287, 0
      %v1430 = vsel %vm1404, %v1290, 0
      %v1433 = vsel %vm1404, %v1293, 0
      %v1436 = vsel %vm1404, %v1296, 0
      %v1439 = vsel %vm1404, %v1299, 0
      %v1442 = vsel %vm1404, %v1302, 0
      %v1445 = vsel %vm1404, %v1305, 0
      %v1448 = vsel %vm1404, %v1308, 0
      %v1451 = vsel %vm1404, %v1311, 0
      %vm1453 = vcmask 1040384
      %v1455 = vsel %vm1453, %v1402, 0
      %v1458 = vsel %vm1453, %v1403, 0
      %1460 = vmatpush.msra.mxu0 %v1342
      %1461 = vmatpush.msra.mxu0 %v1340
      %1462 = vmatpush.msra.mxu0 %v1338
      %1463 = vmatpush.msra.mxu0 %v1336
      %1464 = vmatpush.msra.mxu0 %v1334
      %1465 = vmatpush.msra.mxu0 %v1332
      %1466 = vmatpush.msra.mxu0 %v1330
      %1467 = vmatpush.msra.mxu0 %v1328
      %1468 = vmatpush.msra.mxu0 %v1326
      %1469 = vmatpush.msra.mxu0 %v1324
      %1470 = vmatpush.msra.mxu0 %v1322
      %1471 = vmatpush.msra.mxu0 %v1320
      %1472 = vmatpush.msra.mxu0 %v1318
      %1473 = vmatpush.msra.mxu0 %v1316
      %1474 = vmatpush.msra.mxu0 %v1314
      %1475 = vmatpush.msra.mxu0 %v1312
      %1476 = vmatmul.f32.gmra.mxu0 %v1264
      %v1477 = vpop.f32.mrf.mxu0
      %v1478 = vadd.f32 0.0, %v1477
      %1479 = vmatmul.f32.gmra.mxu0 %v1267
      %v1480 = vpop.f32.mrf.mxu0
      %v1481 = vadd.f32 0.0, %v1480
      %1482 = vmatmul.f32.gmra.mxu0 %v1270
      %v1483 = vpop.f32.mrf.mxu0
      %v1484 = vadd.f32 0.0, %v1483
      %1485 = vmatmul.f32.gmra.mxu0 %v1273
      %v1486 = vpop.f32.mrf.mxu0
      %v1487 = vadd.f32 0.0, %v1486
      %1488 = vmatmul.f32.gmra.mxu0 %v1276
      %v1489 = vpop.f32.mrf.mxu0
      %v1490 = vadd.f32 0.0, %v1489
      %1491 = vmatmul.f32.gmra.mxu0 %v1279
      %v1492 = vpop.f32.mrf.mxu0
      %v1493 = vadd.f32 0.0, %v1492
      %1494 = vmatmul.f32.gmra.mxu0 %v1282
      %v1495 = vpop.f32.mrf.mxu0
      %v1496 = vadd.f32 0.0, %v1495
      %1497 = vmatmul.f32.gmra.mxu0 %v1285
      %v1498 = vpop.f32.mrf.mxu0
      %v1499 = vadd.f32 0.0, %v1498
      %1500 = vmatmul.f32.gmra.mxu0 %v1288
      %v1501 = vpop.f32.mrf.mxu0
      %v1502 = vadd.f32 0.0, %v1501
      %1503 = vmatmul.f32.gmra.mxu0 %v1291
      %v1504 = vpop.f32.mrf.mxu0
      %v1505 = vadd.f32 0.0, %v1504
      %1506 = vmatmul.f32.gmra.mxu0 %v1294
      %v1507 = vpop.f32.mrf.mxu0
      %v1508 = vadd.f32 0.0, %v1507
      %1509 = vmatmul.f32.gmra.mxu0 %v1297
      %v1510 = vpop.f32.mrf.mxu0
      %v1511 = vadd.f32 0.0, %v1510
      %1512 = vmatmul.f32.gmra.mxu0 %v1300
      %v1513 = vpop.f32.mrf.mxu0
      %v1514 = vadd.f32 0.0, %v1513
      %1515 = vmatmul.f32.gmra.mxu0 %v1303
      %v1516 = vpop.f32.mrf.mxu0
      %v1517 = vadd.f32 0.0, %v1516
      %1518 = vmatmul.f32.gmra.mxu0 %v1306
      %v1519 = vpop.f32.mrf.mxu0
      %v1520 = vadd.f32 0.0, %v1519
      %1521 = vmatmul.f32.gmra.mxu0 %v1309
      %v1522 = vpop.f32.mrf.mxu0
      %v1523 = vadd.f32 0.0, %v1522
      %1524 = vdwg.mxu0
      %1525 = vmatpush.msra.mxu0 %v1374
      %1526 = vmatpush.msra.mxu0 %v1372
      %1527 = vmatpush.msra.mxu0 %v1370
      %1528 = vmatpush.msra.mxu0 %v1368
      %1529 = vmatpush.msra.mxu0 %v1366
      %1530 = vmatpush.msra.mxu0 %v1364
      %1531 = vmatpush.msra.mxu0 %v1362
      %1532 = vmatpush.msra.mxu0 %v1360
      %1533 = vmatpush.msra.mxu0 %v1358
      %1534 = vmatpush.msra.mxu0 %v1356
      %1535 = vmatpush.msra.mxu0 %v1354
      %1536 = vmatpush.msra.mxu0 %v1352
      %1537 = vmatpush.msra.mxu0 %v1350
      %1538 = vmatpush.msra.mxu0 %v1348
      %1539 = vmatpush.msra.mxu0 %v1346
      %1540 = vmatpush.msra.mxu0 %v1344
      %1541 = vmatmul.f32.gmra.mxu0 %v1265
      %v1542 = vpop.f32.mrf.mxu0
      %v1543 = vadd.f32 %v1478, %v1542
      %1544 = vmatmul.f32.gmra.mxu0 %v1268
      %v1545 = vpop.f32.mrf.mxu0
      %v1546 = vadd.f32 %v1481, %v1545
      %1547 = vmatmul.f32.gmra.mxu0 %v1271
      %v1548 = vpop.f32.mrf.mxu0
      %v1549 = vadd.f32 %v1484, %v1548
      %1550 = vmatmul.f32.gmra.mxu0 %v1274
      %v1551 = vpop.f32.mrf.mxu0
      %v1552 = vadd.f32 %v1487, %v1551
      %1553 = vmatmul.f32.gmra.mxu0 %v1277
      %v1554 = vpop.f32.mrf.mxu0
      %v1555 = vadd.f32 %v1490, %v1554
      %1556 = vmatmul.f32.gmra.mxu0 %v1280
      %v1557 = vpop.f32.mrf.mxu0
      %v1558 = vadd.f32 %v1493, %v1557
      %1559 = vmatmul.f32.gmra.mxu0 %v1283
      %v1560 = vpop.f32.mrf.mxu0
      %v1561 = vadd.f32 %v1496, %v1560
      %1562 = vmatmul.f32.gmra.mxu0 %v1286
      %v1563 = vpop.f32.mrf.mxu0
      %v1564 = vadd.f32 %v1499, %v1563
      %1565 = vmatmul.f32.gmra.mxu0 %v1289
      %v1566 = vpop.f32.mrf.mxu0
      %v1567 = vadd.f32 %v1502, %v1566
      %1568 = vmatmul.f32.gmra.mxu0 %v1292
      %v1569 = vpop.f32.mrf.mxu0
      %v1570 = vadd.f32 %v1505, %v1569
      %1571 = vmatmul.f32.gmra.mxu0 %v1295
      %v1572 = vpop.f32.mrf.mxu0
      %v1573 = vadd.f32 %v1508, %v1572
      %1574 = vmatmul.f32.gmra.mxu0 %v1298
      %v1575 = vpop.f32.mrf.mxu0
      %v1576 = vadd.f32 %v1511, %v1575
      %1577 = vmatmul.f32.gmra.mxu0 %v1301
      %v1578 = vpop.f32.mrf.mxu0
      %v1579 = vadd.f32 %v1514, %v1578
      %1580 = vmatmul.f32.gmra.mxu0 %v1304
      %v1581 = vpop.f32.mrf.mxu0
      %v1582 = vadd.f32 %v1517, %v1581
      %1583 = vmatmul.f32.gmra.mxu0 %v1307
      %v1584 = vpop.f32.mrf.mxu0
      %v1585 = vadd.f32 %v1520, %v1584
      %1586 = vmatmul.f32.gmra.mxu0 %v1310
      %v1587 = vpop.f32.mrf.mxu0
      %v1588 = vadd.f32 %v1523, %v1587
      %1589 = vdwg.mxu0
      %1590 = vmatpush.msra.mxu0 0.0
      %1591 = vmatpush.msra.mxu0 0.0
      %1592 = vmatpush.msra.mxu0 %v1455
      %1593 = vmatpush.msra.mxu0 %v1400
      %1594 = vmatpush.msra.mxu0 %v1398
      %1595 = vmatpush.msra.mxu0 %v1396
      %1596 = vmatpush.msra.mxu0 %v1394
      %1597 = vmatpush.msra.mxu0 %v1392
      %1598 = vmatpush.msra.mxu0 %v1390
      %1599 = vmatpush.msra.mxu0 %v1388
      %1600 = vmatpush.msra.mxu0 %v1386
      %1601 = vmatpush.msra.mxu0 %v1384
      %1602 = vmatpush.msra.mxu0 %v1382
      %1603 = vmatpush.msra.mxu0 %v1380
      %1604 = vmatpush.msra.mxu0 %v1378
      %1605 = vmatpush.msra.mxu0 %v1376
      %1606 = vmatmul.f32.gmra.mxu0 %v1406
      %v1607 = vpop.f32.mrf.mxu0
      %v1608 = vadd.f32 %v1543, %v1607
      %1609 = vmatmul.f32.gmra.mxu0 %v1409
      %v1610 = vpop.f32.mrf.mxu0
      %v1611 = vadd.f32 %v1546, %v1610
      %1612 = vmatmul.f32.gmra.mxu0 %v1412
      %v1613 = vpop.f32.mrf.mxu0
      %v1614 = vadd.f32 %v1549, %v1613
      %1615 = vmatmul.f32.gmra.mxu0 %v1415
      %v1616 = vpop.f32.mrf.mxu0
      %v1617 = vadd.f32 %v1552, %v1616
      %1618 = vmatmul.f32.gmra.mxu0 %v1418
      %v1619 = vpop.f32.mrf.mxu0
      %v1620 = vadd.f32 %v1555, %v1619
      %1621 = vmatmul.f32.gmra.mxu0 %v1421
      %v1622 = vpop.f32.mrf.mxu0
      %v1623 = vadd.f32 %v1558, %v1622
      %1624 = vmatmul.f32.gmra.mxu0 %v1424
      %v1625 = vpop.f32.mrf.mxu0
      %v1626 = vadd.f32 %v1561, %v1625
      %1627 = vmatmul.f32.gmra.mxu0 %v1427
      %v1628 = vpop.f32.mrf.mxu0
      %v1629 = vadd.f32 %v1564, %v1628
      %1630 = vmatmul.f32.gmra.mxu0 %v1430
      %v1631 = vpop.f32.mrf.mxu0
      %v1632 = vadd.f32 %v1567, %v1631
      %1633 = vmatmul.f32.gmra.mxu0 %v1433
      %v1634 = vpop.f32.mrf.mxu0
      %v1635 = vadd.f32 %v1570, %v1634
      %1636 = vmatmul.f32.gmra.mxu0 %v1436
      %v1637 = vpop.f32.mrf.mxu0
      %v1638 = vadd.f32 %v1573, %v1637
      %1639 = vmatmul.f32.gmra.mxu0 %v1439
      %v1640 = vpop.f32.mrf.mxu0
      %v1641 = vadd.f32 %v1576, %v1640
      %1642 = vmatmul.f32.gmra.mxu0 %v1442
      %v1643 = vpop.f32.mrf.mxu0
      %v1644 = vadd.f32 %v1579, %v1643
      %1645 = vmatmul.f32.gmra.mxu0 %v1445
      %v1646 = vpop.f32.mrf.mxu0
      %v1647 = vadd.f32 %v1582, %v1646
      %1648 = vmatmul.f32.gmra.mxu0 %v1448
      %v1649 = vpop.f32.mrf.mxu0
      %v1650 = vadd.f32 %v1585, %v1649
      %1651 = vmatmul.f32.gmra.mxu0 %v1451
      %v1652 = vpop.f32.mrf.mxu0
      %v1653 = vadd.f32 %v1588, %v1652
      %1654 = vdwg.mxu0
      %1655 = vmatpush.msra.mxu0 %v1343
      %1656 = vmatpush.msra.mxu0 %v1341
      %1657 = vmatpush.msra.mxu0 %v1339
      %1658 = vmatpush.msra.mxu0 %v1337
      %1659 = vmatpush.msra.mxu0 %v1335
      %1660 = vmatpush.msra.mxu0 %v1333
      %1661 = vmatpush.msra.mxu0 %v1331
      %1662 = vmatpush.msra.mxu0 %v1329
      %1663 = vmatpush.msra.mxu0 %v1327
      %1664 = vmatpush.msra.mxu0 %v1325
      %1665 = vmatpush.msra.mxu0 %v1323
      %1666 = vmatpush.msra.mxu0 %v1321
      %1667 = vmatpush.msra.mxu0 %v1319
      %1668 = vmatpush.msra.mxu0 %v1317
      %1669 = vmatpush.msra.mxu0 %v1315
      %1670 = vmatpush.msra.mxu0 %v1313
      %1671 = vmatmul.f32.gmra.mxu0 %v1264
      %v1672 = vpop.f32.mrf.mxu0
      %v1673 = vadd.f32 0.0, %v1672
      %1674 = vmatmul.f32.gmra.mxu0 %v1267
      %v1675 = vpop.f32.mrf.mxu0
      %v1676 = vadd.f32 0.0, %v1675
      %1677 = vmatmul.f32.gmra.mxu0 %v1270
      %v1678 = vpop.f32.mrf.mxu0
      %v1679 = vadd.f32 0.0, %v1678
      %1680 = vmatmul.f32.gmra.mxu0 %v1273
      %v1681 = vpop.f32.mrf.mxu0
      %v1682 = vadd.f32 0.0, %v1681
      %1683 = vmatmul.f32.gmra.mxu0 %v1276
      %v1684 = vpop.f32.mrf.mxu0
      %v1685 = vadd.f32 0.0, %v1684
      %1686 = vmatmul.f32.gmra.mxu0 %v1279
      %v1687 = vpop.f32.mrf.mxu0
      %v1688 = vadd.f32 0.0, %v1687
      %1689 = vmatmul.f32.gmra.mxu0 %v1282
      %v1690 = vpop.f32.mrf.mxu0
      %v1691 = vadd.f32 0.0, %v1690
      %1692 = vmatmul.f32.gmra.mxu0 %v1285
      %v1693 = vpop.f32.mrf.mxu0
      %v1694 = vadd.f32 0.0, %v1693
      %1695 = vmatmul.f32.gmra.mxu0 %v1288
      %v1696 = vpop.f32.mrf.mxu0
      %v1697 = vadd.f32 0.0, %v1696
      %1698 = vmatmul.f32.gmra.mxu0 %v1291
      %v1699 = vpop.f32.mrf.mxu0
      %v1700 = vadd.f32 0.0, %v1699
      %1701 = vmatmul.f32.gmra.mxu0 %v1294
      %v1702 = vpop.f32.mrf.mxu0
      %v1703 = vadd.f32 0.0, %v1702
      %1704 = vmatmul.f32.gmra.mxu0 %v1297
      %v1705 = vpop.f32.mrf.mxu0
      %v1706 = vadd.f32 0.0, %v1705
      %1707 = vmatmul.f32.gmra.mxu0 %v1300
      %v1708 = vpop.f32.mrf.mxu0
      %v1709 = vadd.f32 0.0, %v1708
      %1710 = vmatmul.f32.gmra.mxu0 %v1303
      %v1711 = vpop.f32.mrf.mxu0
      %v1712 = vadd.f32 0.0, %v1711
      %1713 = vmatmul.f32.gmra.mxu0 %v1306
      %v1714 = vpop.f32.mrf.mxu0
      %v1715 = vadd.f32 0.0, %v1714
      %1716 = vmatmul.f32.gmra.mxu0 %v1309
      %v1717 = vpop.f32.mrf.mxu0
      %v1718 = vadd.f32 0.0, %v1717
      %1719 = vdwg.mxu0
      %1720 = vmatpush.msra.mxu0 %v1375
      %1721 = vmatpush.msra.mxu0 %v1373
      %1722 = vmatpush.msra.mxu0 %v1371
      %1723 = vmatpush.msra.mxu0 %v1369
      %1724 = vmatpush.msra.mxu0 %v1367
      %1725 = vmatpush.msra.mxu0 %v1365
      %1726 = vmatpush.msra.mxu0 %v1363
      %1727 = vmatpush.msra.mxu0 %v1361
      %1728 = vmatpush.msra.mxu0 %v1359
      %1729 = vmatpush.msra.mxu0 %v1357
      %1730 = vmatpush.msra.mxu0 %v1355
      %1731 = vmatpush.msra.mxu0 %v1353
      %1732 = vmatpush.msra.mxu0 %v1351
      %1733 = vmatpush.msra.mxu0 %v1349
      %1734 = vmatpush.msra.mxu0 %v1347
      %1735 = vmatpush.msra.mxu0 %v1345
      %1736 = vmatmul.f32.gmra.mxu0 %v1265
      %v1737 = vpop.f32.mrf.mxu0
      %v1738 = vadd.f32 %v1673, %v1737
      %1739 = vmatmul.f32.gmra.mxu0 %v1268
      %v1740 = vpop.f32.mrf.mxu0
      %v1741 = vadd.f32 %v1676, %v1740
      %1742 = vmatmul.f32.gmra.mxu0 %v1271
      %v1743 = vpop.f32.mrf.mxu0
      %v1744 = vadd.f32 %v1679, %v1743
      %1745 = vmatmul.f32.gmra.mxu0 %v1274
      %v1746 = vpop.f32.mrf.mxu0
      %v1747 = vadd.f32 %v1682, %v1746
      %1748 = vmatmul.f32.gmra.mxu0 %v1277
      %v1749 = vpop.f32.mrf.mxu0
      %v1750 = vadd.f32 %v1685, %v1749
      %1751 = vmatmul.f32.gmra.mxu0 %v1280
      %v1752 = vpop.f32.mrf.mxu0
      %v1753 = vadd.f32 %v1688, %v1752
      %1754 = vmatmul.f32.gmra.mxu0 %v1283
      %v1755 = vpop.f32.mrf.mxu0
      %v1756 = vadd.f32 %v1691, %v1755
      %1757 = vmatmul.f32.gmra.mxu0 %v1286
      %v1758 = vpop.f32.mrf.mxu0
      %v1759 = vadd.f32 %v1694, %v1758
      %1760 = vmatmul.f32.gmra.mxu0 %v1289
      %v1761 = vpop.f32.mrf.mxu0
      %v1762 = vadd.f32 %v1697, %v1761
      %1763 = vmatmul.f32.gmra.mxu0 %v1292
      %v1764 = vpop.f32.mrf.mxu0
      %v1765 = vadd.f32 %v1700, %v1764
      %1766 = vmatmul.f32.gmra.mxu0 %v1295
      %v1767 = vpop.f32.mrf.mxu0
      %v1768 = vadd.f32 %v1703, %v1767
      %1769 = vmatmul.f32.gmra.mxu0 %v1298
      %v1770 = vpop.f32.mrf.mxu0
      %v1771 = vadd.f32 %v1706, %v1770
      %1772 = vmatmul.f32.gmra.mxu0 %v1301
      %v1773 = vpop.f32.mrf.mxu0
      %v1774 = vadd.f32 %v1709, %v1773
      %1775 = vmatmul.f32.gmra.mxu0 %v1304
      %v1776 = vpop.f32.mrf.mxu0
      %v1777 = vadd.f32 %v1712, %v1776
      %1778 = vmatmul.f32.gmra.mxu0 %v1307
      %v1779 = vpop.f32.mrf.mxu0
      %v1780 = vadd.f32 %v1715, %v1779
      %1781 = vmatmul.f32.gmra.mxu0 %v1310
      %v1782 = vpop.f32.mrf.mxu0
      %v1783 = vadd.f32 %v1718, %v1782
      %1784 = vdwg.mxu0
      %1785 = vmatpush.msra.mxu0 0.0
      %1786 = vmatpush.msra.mxu0 0.0
      %1787 = vmatpush.msra.mxu0 %v1458
      %1788 = vmatpush.msra.mxu0 %v1401
      %1789 = vmatpush.msra.mxu0 %v1399
      %1790 = vmatpush.msra.mxu0 %v1397
      %1791 = vmatpush.msra.mxu0 %v1395
      %1792 = vmatpush.msra.mxu0 %v1393
      %1793 = vmatpush.msra.mxu0 %v1391
      %1794 = vmatpush.msra.mxu0 %v1389
      %1795 = vmatpush.msra.mxu0 %v1387
      %1796 = vmatpush.msra.mxu0 %v1385
      %1797 = vmatpush.msra.mxu0 %v1383
      %1798 = vmatpush.msra.mxu0 %v1381
      %1799 = vmatpush.msra.mxu0 %v1379
      %1800 = vmatpush.msra.mxu0 %v1377
      %1801 = vmatmul.f32.gmra.mxu0 %v1406
      %v1802 = vpop.f32.mrf.mxu0
      %v1803 = vadd.f32 %v1738, %v1802
      %1804 = vmatmul.f32.gmra.mxu0 %v1409
      %v1805 = vpop.f32.mrf.mxu0
      %v1806 = vadd.f32 %v1741, %v1805
      %1807 = vmatmul.f32.gmra.mxu0 %v1412
      %v1808 = vpop.f32.mrf.mxu0
      %v1809 = vadd.f32 %v1744, %v1808
      %1810 = vmatmul.f32.gmra.mxu0 %v1415
      %v1811 = vpop.f32.mrf.mxu0
      %v1812 = vadd.f32 %v1747, %v1811
      %1813 = vmatmul.f32.gmra.mxu0 %v1418
      %v1814 = vpop.f32.mrf.mxu0
      %v1815 = vadd.f32 %v1750, %v1814
      %1816 = vmatmul.f32.gmra.mxu0 %v1421
      %v1817 = vpop.f32.mrf.mxu0
      %v1818 = vadd.f32 %v1753, %v1817
      %1819 = vmatmul.f32.gmra.mxu0 %v1424
      %v1820 = vpop.f32.mrf.mxu0
      %v1821 = vadd.f32 %v1756, %v1820
      %1822 = vmatmul.f32.gmra.mxu0 %v1427
      %v1823 = vpop.f32.mrf.mxu0
      %v1824 = vadd.f32 %v1759, %v1823
      %1825 = vmatmul.f32.gmra.mxu0 %v1430
      %v1826 = vpop.f32.mrf.mxu0
      %v1827 = vadd.f32 %v1762, %v1826
      %1828 = vmatmul.f32.gmra.mxu0 %v1433
      %v1829 = vpop.f32.mrf.mxu0
      %v1830 = vadd.f32 %v1765, %v1829
      %1831 = vmatmul.f32.gmra.mxu0 %v1436
      %v1832 = vpop.f32.mrf.mxu0
      %v1833 = vadd.f32 %v1768, %v1832
      %1834 = vmatmul.f32.gmra.mxu0 %v1439
      %v1835 = vpop.f32.mrf.mxu0
      %v1836 = vadd.f32 %v1771, %v1835
      %1837 = vmatmul.f32.gmra.mxu0 %v1442
      %v1838 = vpop.f32.mrf.mxu0
      %v1839 = vadd.f32 %v1774, %v1838
      %1840 = vmatmul.f32.gmra.mxu0 %v1445
      %v1841 = vpop.f32.mrf.mxu0
      %v1842 = vadd.f32 %v1777, %v1841
      %1843 = vmatmul.f32.gmra.mxu0 %v1448
      %v1844 = vpop.f32.mrf.mxu0
      %v1845 = vadd.f32 %v1780, %v1844
      %1846 = vmatmul.f32.gmra.mxu0 %v1451
      %v1847 = vpop.f32.mrf.mxu0
      %v1848 = vadd.f32 %v1783, %v1847
      %1849 = vdwg.mxu0
      %1850 = vst [vmem:[#allocation4] sm:$0xff] %v1608
      %1851 = vst [vmem:[#allocation4 + $0x8] sm:$0xff] %v1803
      %1852 = vst [vmem:[#allocation4 + $0x10] sm:$0xff] %v1611
      %1853 = vst [vmem:[#allocation4 + $0x18] sm:$0xff] %v1806
      %1854 = vst [vmem:[#allocation4 + $0x20] sm:$0xff] %v1614
      %1855 = vst [vmem:[#allocation4 + $0x28] sm:$0xff] %v1809
      %1856 = vst [vmem:[#allocation4 + $0x30] sm:$0xff] %v1617
      %1857 = vst [vmem:[#allocation4 + $0x38] sm:$0xff] %v1812
      %1858 = vst [vmem:[#allocation4 + $0x40] sm:$0xff] %v1620
      %1859 = vst [vmem:[#allocation4 + $0x48] sm:$0xff] %v1815
      %1860 = vst [vmem:[#allocation4 + $0x50] sm:$0xff] %v1623
      %1861 = vst [vmem:[#allocation4 + $0x58] sm:$0xff] %v1818
      %1862 = vst [vmem:[#allocation4 + $0x60] sm:$0xff] %v1626
      %1863 = vst [vmem:[#allocation4 + $0x68] sm:$0xff] %v1821
      %1864 = vst [vmem:[#allocation4 + $0x70] sm:$0xff] %v1629
      %1865 = vst [vmem:[#allocation4 + $0x78] sm:$0xff] %v1824
      %1866 = vst [vmem:[#allocation4 + $0x80] sm:$0xff] %v1632
      %1867 = vst [vmem:[#allocation4 + $0x88] sm:$0xff] %v1827
      %1868 = vst [vmem:[#allocation4 + $0x90] sm:$0xff] %v1635
      %1869 = vst [vmem:[#allocation4 + $0x98] sm:$0xff] %v1830
      %1870 = vst [vmem:[#allocation4 + $0xa0] sm:$0xff] %v1638
      %1871 = vst [vmem:[#allocation4 + $0xa8] sm:$0xff] %v1833
      %1872 = vst [vmem:[#allocation4 + $0xb0] sm:$0xff] %v1641
      %1873 = vst [vmem:[#allocation4 + $0xb8] sm:$0xff] %v1836
      %1874 = vst [vmem:[#allocation4 + $0xc0] sm:$0xff] %v1644
      %1875 = vst [vmem:[#allocation4 + $0xc8] sm:$0xff] %v1839
      %1876 = vst [vmem:[#allocation4 + $0xd0] sm:$0xff] %v1647
      %1877 = vst [vmem:[#allocation4 + $0xd8] sm:$0xff] %v1842
      %1878 = vst [vmem:[#allocation4 + $0xe0] sm:$0xff] %v1650
      %1879 = vst [vmem:[#allocation4 + $0xe8] sm:$0xff] %v1845
      %1880 = vst [vmem:[#allocation4 + $0xf0] sm:$0xff] %v1653
      %1881 = vst [vmem:[#allocation4 + $0xf8] sm:$0xff] %v1848
      %v1882 = vld [vmem:[#allocation4] sm:$0xff]
      %v1883 = vld [vmem:[#allocation4 + $0x10] sm:$0xff]
      %v1884 = vld [vmem:[#allocation4 + $0x20] sm:$0xff]
      %v1885 = vld [vmem:[#allocation4 + $0x30] sm:$0xff]
      %v1886 = vxor.u32 %v1882, 2147483648
      %v1887 = vxor.u32 %v1883, 2147483648
      %v1888 = vxor.u32 %v1884, 2147483648
      %v1889 = vxor.u32 %v1885, 2147483648
      %v1890 = vmul.f32 %v1886, 1.442695
      %v1891 = vpow.pop %v1890
      %v1892 = vmul.f32 %v1887, 1.442695
      %v1893 = vpow.pop %v1892
      %v1894 = vmul.f32 %v1888, 1.442695
      %v1895 = vpow.pop %v1894
      %v1896 = vmul.f32 %v1889, 1.442695
      %v1897 = vpow.pop %v1896
      %v1898 = vadd.f32 %v1891, 1.0
      %v1899 = vadd.f32 %v1893, 1.0
      %v1900 = vadd.f32 %v1895, 1.0
      %v1901 = vadd.f32 %v1897, 1.0
      %v1902 = vrcp.pop %v1898
      %v1903 = vmul.f32 %v1898, %v1902
      %v1904 = vsub.f32 1.0, %v1903
      %v1905 = vmul.f32 %v1902, %v1904
      %v1906 = vadd.f32 %v1902, %v1905
      %vm1907 = vweird.f32 %v1898
      %vm1908 = vweird.f32 %v1902
      %vm1909 = vmor %vm1907, %vm1908
      %v1910 = vsel %vm1909, %v1902, %v1906
      %v1911 = vand.u32 2147483647, %v1898
      %vm1912 = vcmp.eq.f32.partialorder %v1911, 8.507059e+37
      %v1913 = vand.u32 %v1898, 2147483648
      %v1914 = vor.u32 1.1754944e-38, %v1913
      %v1915 = vsel %vm1912, %v1914, %v1910
      %v1916 = vmul.f32 1.0, %v1915
      %v1917 = vrcp.pop %v1899
      %v1918 = vmul.f32 %v1899, %v1917
      %v1919 = vsub.f32 1.0, %v1918
      %v1920 = vmul.f32 %v1917, %v1919
      %v1921 = vadd.f32 %v1917, %v1920
      %vm1922 = vweird.f32 %v1899
      %vm1923 = vweird.f32 %v1917
      %vm1924 = vmor %vm1922, %vm1923
      %v1925 = vsel %vm1924, %v1917, %v1921
      %v1926 = vand.u32 2147483647, %v1899
      %vm1927 = vcmp.eq.f32.partialorder %v1926, 8.507059e+37
      %v1928 = vand.u32 %v1899, 2147483648
      %v1929 = vor.u32 1.1754944e-38, %v1928
      %v1930 = vsel %vm1927, %v1929, %v1925
      %v1931 = vmul.f32 1.0, %v1930
      %v1932 = vrcp.pop %v1900
      %v1933 = vmul.f32 %v1900, %v1932
      %v1934 = vsub.f32 1.0, %v1933
      %v1935 = vmul.f32 %v1932, %v1934
      %v1936 = vadd.f32 %v1932, %v1935
      %vm1937 = vweird.f32 %v1900
      %vm1938 = vweird.f32 %v1932
      %vm1939 = vmor %vm1937, %vm1938
      %v1940 = vsel %vm1939, %v1932, %v1936
      %v1941 = vand.u32 2147483647, %v1900
      %vm1942 = vcmp.eq.f32.partialorder %v1941, 8.507059e+37
      %v1943 = vand.u32 %v1900, 2147483648
      %v1944 = vor.u32 1.1754944e-38, %v1943
      %v1945 = vsel %vm1942, %v1944, %v1940
      %v1946 = vmul.f32 1.0, %v1945
      %v1947 = vrcp.pop %v1901
      %v1948 = vmul.f32 %v1901, %v1947
      %v1949 = vsub.f32 1.0, %v1948
      %v1950 = vmul.f32 %v1947, %v1949
      %v1951 = vadd.f32 %v1947, %v1950
      %vm1952 = vweird.f32 %v1901
      %vm1953 = vweird.f32 %v1947
      %vm1954 = vmor %vm1952, %vm1953
      %v1955 = vsel %vm1954, %v1947, %v1951
      %v1956 = vand.u32 2147483647, %v1901
      %vm1957 = vcmp.eq.f32.partialorder %v1956, 8.507059e+37
      %v1958 = vand.u32 %v1901, 2147483648
      %v1959 = vor.u32 1.1754944e-38, %v1958
      %v1960 = vsel %vm1957, %v1959, %v1955
      %v1961 = vmul.f32 1.0, %v1960
      %v1962 = vld [vmem:[#allocation4 + $0x40] sm:$0xff]
      %v1963 = vld [vmem:[#allocation4 + $0x50] sm:$0xff]
      %v1964 = vld [vmem:[#allocation4 + $0x60] sm:$0xff]
      %v1965 = vld [vmem:[#allocation4 + $0x70] sm:$0xff]
      %v1966 = vxor.u32 %v1962, 2147483648
      %v1967 = vxor.u32 %v1963, 2147483648
      %v1968 = vxor.u32 %v1964, 2147483648
      %v1969 = vxor.u32 %v1965, 2147483648
      %v1970 = vmul.f32 %v1966, 1.442695
      %v1971 = vpow.pop %v1970
      %v1972 = vmul.f32 %v1967, 1.442695
      %v1973 = vpow.pop %v1972
      %v1974 = vmul.f32 %v1968, 1.442695
      %v1975 = vpow.pop %v1974
      %v1976 = vmul.f32 %v1969, 1.442695
      %v1977 = vpow.pop %v1976
      %v1978 = vadd.f32 %v1971, 1.0
      %v1979 = vadd.f32 %v1973, 1.0
      %v1980 = vadd.f32 %v1975, 1.0
      %v1981 = vadd.f32 %v1977, 1.0
      %v1982 = vrcp.pop %v1978
      %v1983 = vmul.f32 %v1978, %v1982
      %v1984 = vsub.f32 1.0, %v1983
      %v1985 = vmul.f32 %v1982, %v1984
      %v1986 = vadd.f32 %v1982, %v1985
      %vm1987 = vweird.f32 %v1978
      %vm1988 = vweird.f32 %v1982
      %vm1989 = vmor %vm1987, %vm1988
      %v1990 = vsel %vm1989, %v1982, %v1986
      %v1991 = vand.u32 2147483647, %v1978
      %vm1992 = vcmp.eq.f32.partialorder %v1991, 8.507059e+37
      %v1993 = vand.u32 %v1978, 2147483648
      %v1994 = vor.u32 1.1754944e-38, %v1993
      %v1995 = vsel %vm1992, %v1994, %v1990
      %v1996 = vmul.f32 1.0, %v1995
      %v1997 = vrcp.pop %v1979
      %v1998 = vmul.f32 %v1979, %v1997
      %v1999 = vsub.f32 1.0, %v1998
      %v2000 = vmul.f32 %v1997, %v1999
      %v2001 = vadd.f32 %v1997, %v2000
      %vm2002 = vweird.f32 %v1979
      %vm2003 = vweird.f32 %v1997
      %vm2004 = vmor %vm2002, %vm2003
      %v2005 = vsel %vm2004, %v1997, %v2001
      %v2006 = vand.u32 2147483647, %v1979
      %vm2007 = vcmp.eq.f32.partialorder %v2006, 8.507059e+37
      %v2008 = vand.u32 %v1979, 2147483648
      %v2009 = vor.u32 1.1754944e-38, %v2008
      %v2010 = vsel %vm2007, %v2009, %v2005
      %v2011 = vmul.f32 1.0, %v2010
      %v2012 = vrcp.pop %v1980
      %v2013 = vmul.f32 %v1980, %v2012
      %v2014 = vsub.f32 1.0, %v2013
      %v2015 = vmul.f32 %v2012, %v2014
      %v2016 = vadd.f32 %v2012, %v2015
      %vm2017 = vweird.f32 %v1980
      %vm2018 = vweird.f32 %v2012
      %vm2019 = vmor %vm2017, %vm2018
      %v2020 = vsel %vm2019, %v2012, %v2016
      %v2021 = vand.u32 2147483647, %v1980
      %vm2022 = vcmp.eq.f32.partialorder %v2021, 8.507059e+37
      %v2023 = vand.u32 %v1980, 2147483648
      %v2024 = vor.u32 1.1754944e-38, %v2023
      %v2025 = vsel %vm2022, %v2024, %v2020
      %v2026 = vmul.f32 1.0, %v2025
      %v2027 = vrcp.pop %v1981
      %v2028 = vmul.f32 %v1981, %v2027
      %v2029 = vsub.f32 1.0, %v2028
      %v2030 = vmul.f32 %v2027, %v2029
      %v2031 = vadd.f32 %v2027, %v2030
      %vm2032 = vweird.f32 %v1981
      %vm2033 = vweird.f32 %v2027
      %vm2034 = vmor %vm2032, %vm2033
      %v2035 = vsel %vm2034, %v2027, %v2031
      %v2036 = vand.u32 2147483647, %v1981
      %vm2037 = vcmp.eq.f32.partialorder %v2036, 8.507059e+37
      %v2038 = vand.u32 %v1981, 2147483648
      %v2039 = vor.u32 1.1754944e-38, %v2038
      %v2040 = vsel %vm2037, %v2039, %v2035
      %v2041 = vmul.f32 1.0, %v2040
      %v2042 = vld [vmem:[#allocation4 + $0x80] sm:$0xff]
      %v2043 = vld [vmem:[#allocation4 + $0x90] sm:$0xff]
      %v2044 = vld [vmem:[#allocation4 + $0xa0] sm:$0xff]
      %v2045 = vld [vmem:[#allocation4 + $0xb0] sm:$0xff]
      %v2046 = vxor.u32 %v2042, 2147483648
      %v2047 = vxor.u32 %v2043, 2147483648
      %v2048 = vxor.u32 %v2044, 2147483648
      %v2049 = vxor.u32 %v2045, 2147483648
      %v2050 = vmul.f32 %v2046, 1.442695
      %v2051 = vpow.pop %v2050
      %v2052 = vmul.f32 %v2047, 1.442695
      %v2053 = vpow.pop %v2052
      %v2054 = vmul.f32 %v2048, 1.442695
      %v2055 = vpow.pop %v2054
      %v2056 = vmul.f32 %v2049, 1.442695
      %v2057 = vpow.pop %v2056
      %v2058 = vadd.f32 %v2051, 1.0
      %v2059 = vadd.f32 %v2053, 1.0
      %v2060 = vadd.f32 %v2055, 1.0
      %v2061 = vadd.f32 %v2057, 1.0
      %v2062 = vrcp.pop %v2058
      %v2063 = vmul.f32 %v2058, %v2062
      %v2064 = vsub.f32 1.0, %v2063
      %v2065 = vmul.f32 %v2062, %v2064
      %v2066 = vadd.f32 %v2062, %v2065
      %vm2067 = vweird.f32 %v2058
      %vm2068 = vweird.f32 %v2062
      %vm2069 = vmor %vm2067, %vm2068
      %v2070 = vsel %vm2069, %v2062, %v2066
      %v2071 = vand.u32 2147483647, %v2058
      %vm2072 = vcmp.eq.f32.partialorder %v2071, 8.507059e+37
      %v2073 = vand.u32 %v2058, 2147483648
      %v2074 = vor.u32 1.1754944e-38, %v2073
      %v2075 = vsel %vm2072, %v2074, %v2070
      %v2076 = vmul.f32 1.0, %v2075
      %v2077 = vrcp.pop %v2059
      %v2078 = vmul.f32 %v2059, %v2077
      %v2079 = vsub.f32 1.0, %v2078
      %v2080 = vmul.f32 %v2077, %v2079
      %v2081 = vadd.f32 %v2077, %v2080
      %vm2082 = vweird.f32 %v2059
      %vm2083 = vweird.f32 %v2077
      %vm2084 = vmor %vm2082, %vm2083
      %v2085 = vsel %vm2084, %v2077, %v2081
      %v2086 = vand.u32 2147483647, %v2059
      %vm2087 = vcmp.eq.f32.partialorder %v2086, 8.507059e+37
      %v2088 = vand.u32 %v2059, 2147483648
      %v2089 = vor.u32 1.1754944e-38, %v2088
      %v2090 = vsel %vm2087, %v2089, %v2085
      %v2091 = vmul.f32 1.0, %v2090
      %v2092 = vrcp.pop %v2060
      %v2093 = vmul.f32 %v2060, %v2092
      %v2094 = vsub.f32 1.0, %v2093
      %v2095 = vmul.f32 %v2092, %v2094
      %v2096 = vadd.f32 %v2092, %v2095
      %vm2097 = vweird.f32 %v2060
      %vm2098 = vweird.f32 %v2092
      %vm2099 = vmor %vm2097, %vm2098
      %v2100 = vsel %vm2099, %v2092, %v2096
      %v2101 = vand.u32 2147483647, %v2060
      %vm2102 = vcmp.eq.f32.partialorder %v2101, 8.507059e+37
      %v2103 = vand.u32 %v2060, 2147483648
      %v2104 = vor.u32 1.1754944e-38, %v2103
      %v2105 = vsel %vm2102, %v2104, %v2100
      %v2106 = vmul.f32 1.0, %v2105
      %v2107 = vrcp.pop %v2061
      %v2108 = vmul.f32 %v2061, %v2107
      %v2109 = vsub.f32 1.0, %v2108
      %v2110 = vmul.f32 %v2107, %v2109
      %v2111 = vadd.f32 %v2107, %v2110
      %vm2112 = vweird.f32 %v2061
      %vm2113 = vweird.f32 %v2107
      %vm2114 = vmor %vm2112, %vm2113
      %v2115 = vsel %vm2114, %v2107, %v2111
      %v2116 = vand.u32 2147483647, %v2061
      %vm2117 = vcmp.eq.f32.partialorder %v2116, 8.507059e+37
      %v2118 = vand.u32 %v2061, 2147483648
      %v2119 = vor.u32 1.1754944e-38, %v2118
      %v2120 = vsel %vm2117, %v2119, %v2115
      %v2121 = vmul.f32 1.0, %v2120
      %v2122 = vld [vmem:[#allocation4 + $0xc0] sm:$0xff]
      %v2123 = vld [vmem:[#allocation4 + $0xd0] sm:$0xff]
      %v2124 = vld [vmem:[#allocation4 + $0xe0] sm:$0xff]
      %v2125 = vld [vmem:[#allocation4 + $0xf0] sm:$0xff]
      %v2126 = vtanh.pop %v2122
      %v2127 = vtanh.pop %v2123
      %v2128 = vtanh.pop %v2124
      %v2129 = vtanh.pop %v2125
      %v2130 = vld [vmem:[%s267] sm:$0xff]
      %v2131 = vld [vmem:[%s267 + $0x10] sm:$0xff]
      %v2132 = vld [vmem:[%s267 + $0x20] sm:$0xff]
      %v2133 = vld [vmem:[%s267 + $0x30] sm:$0xff]
      %v2134 = vmul.f32 %v1996, %v2130
      %v2135 = vmul.f32 %v2011, %v2131
      %v2136 = vmul.f32 %v2026, %v2132
      %v2137 = vmul.f32 %v2041, %v2133
      %v2138 = vmul.f32 %v1916, %v2126
      %v2139 = vmul.f32 %v1931, %v2127
      %v2140 = vmul.f32 %v1946, %v2128
      %v2141 = vmul.f32 %v1961, %v2129
      %v2142 = vadd.f32 %v2134, %v2138
      %v2143 = vadd.f32 %v2135, %v2139
      %v2144 = vadd.f32 %v2136, %v2140
      %v2145 = vadd.f32 %v2137, %v2141
      %v2146 = vtanh.pop %v2142
      %v2147 = vtanh.pop %v2143
      %v2148 = vtanh.pop %v2144
      %v2149 = vtanh.pop %v2145
      %v2150 = vmul.f32 %v2076, %v2146
      %v2151 = vmul.f32 %v2091, %v2147
      %v2152 = vmul.f32 %v2106, %v2148
      %v2153 = vmul.f32 %v2121, %v2149
      %2154 = vst [vmem:[%s272] sm:$0xff] %v2150
      %2155 = vst [vmem:[%s272 + $0x10] sm:$0xff] %v2151
      %2156 = vst [vmem:[%s272 + $0x20] sm:$0xff] %v2152
      %2157 = vst [vmem:[%s272 + $0x30] sm:$0xff] %v2153
      %2158 = vst [vmem:[%s277] sm:$0xff] %v2142
      %2159 = vst [vmem:[%s277 + $0x10] sm:$0xff] %v2143
      %2160 = vst [vmem:[%s277 + $0x20] sm:$0xff] %v2144
      %2161 = vst [vmem:[%s277 + $0x30] sm:$0xff] %v2145
      %v2162 = vld [vmem:[#allocation4 + $0x8] sm:$0xff]
      %v2163 = vld [vmem:[#allocation4 + $0x18] sm:$0xff]
      %v2164 = vld [vmem:[#allocation4 + $0x28] sm:$0xff]
      %v2165 = vld [vmem:[#allocation4 + $0x38] sm:$0xff]
      %v2166 = vxor.u32 %v2162, 2147483648
      %v2167 = vxor.u32 %v2163, 2147483648
      %v2168 = vxor.u32 %v2164, 2147483648
      %v2169 = vxor.u32 %v2165, 2147483648
      %v2170 = vmul.f32 %v2166, 1.442695
      %v2171 = vpow.pop %v2170
      %v2172 = vmul.f32 %v2167, 1.442695
      %v2173 = vpow.pop %v2172
      %v2174 = vmul.f32 %v2168, 1.442695
      %v2175 = vpow.pop %v2174
      %v2176 = vmul.f32 %v2169, 1.442695
      %v2177 = vpow.pop %v2176
      %v2178 = vadd.f32 %v2171, 1.0
      %v2179 = vadd.f32 %v2173, 1.0
      %v2180 = vadd.f32 %v2175, 1.0
      %v2181 = vadd.f32 %v2177, 1.0
      %v2182 = vrcp.pop %v2178
      %v2183 = vmul.f32 %v2178, %v2182
      %v2184 = vsub.f32 1.0, %v2183
      %v2185 = vmul.f32 %v2182, %v2184
      %v2186 = vadd.f32 %v2182, %v2185
      %vm2187 = vweird.f32 %v2178
      %vm2188 = vweird.f32 %v2182
      %vm2189 = vmor %vm2187, %vm2188
      %v2190 = vsel %vm2189, %v2182, %v2186
      %v2191 = vand.u32 2147483647, %v2178
      %vm2192 = vcmp.eq.f32.partialorder %v2191, 8.507059e+37
      %v2193 = vand.u32 %v2178, 2147483648
      %v2194 = vor.u32 1.1754944e-38, %v2193
      %v2195 = vsel %vm2192, %v2194, %v2190
      %v2196 = vmul.f32 1.0, %v2195
      %v2197 = vrcp.pop %v2179
      %v2198 = vmul.f32 %v2179, %v2197
      %v2199 = vsub.f32 1.0, %v2198
      %v2200 = vmul.f32 %v2197, %v2199
      %v2201 = vadd.f32 %v2197, %v2200
      %vm2202 = vweird.f32 %v2179
      %vm2203 = vweird.f32 %v2197
      %vm2204 = vmor %vm2202, %vm2203
      %v2205 = vsel %vm2204, %v2197, %v2201
      %v2206 = vand.u32 2147483647, %v2179
      %vm2207 = vcmp.eq.f32.partialorder %v2206, 8.507059e+37
      %v2208 = vand.u32 %v2179, 2147483648
      %v2209 = vor.u32 1.1754944e-38, %v2208
      %v2210 = vsel %vm2207, %v2209, %v2205
      %v2211 = vmul.f32 1.0, %v2210
      %v2212 = vrcp.pop %v2180
      %v2213 = vmul.f32 %v2180, %v2212
      %v2214 = vsub.f32 1.0, %v2213
      %v2215 = vmul.f32 %v2212, %v2214
      %v2216 = vadd.f32 %v2212, %v2215
      %vm2217 = vweird.f32 %v2180
      %vm2218 = vweird.f32 %v2212
      %vm2219 = vmor %vm2217, %vm2218
      %v2220 = vsel %vm2219, %v2212, %v2216
      %v2221 = vand.u32 2147483647, %v2180
      %vm2222 = vcmp.eq.f32.partialorder %v2221, 8.507059e+37
      %v2223 = vand.u32 %v2180, 2147483648
      %v2224 = vor.u32 1.1754944e-38, %v2223
      %v2225 = vsel %vm2222, %v2224, %v2220
      %v2226 = vmul.f32 1.0, %v2225
      %v2227 = vrcp.pop %v2181
      %v2228 = vmul.f32 %v2181, %v2227
      %v2229 = vsub.f32 1.0, %v2228
      %v2230 = vmul.f32 %v2227, %v2229
      %v2231 = vadd.f32 %v2227, %v2230
      %vm2232 = vweird.f32 %v2181
      %vm2233 = vweird.f32 %v2227
      %vm2234 = vmor %vm2232, %vm2233
      %v2235 = vsel %vm2234, %v2227, %v2231
      %v2236 = vand.u32 2147483647, %v2181
      %vm2237 = vcmp.eq.f32.partialorder %v2236, 8.507059e+37
      %v2238 = vand.u32 %v2181, 2147483648
      %v2239 = vor.u32 1.1754944e-38, %v2238
      %v2240 = vsel %vm2237, %v2239, %v2235
      %v2241 = vmul.f32 1.0, %v2240
      %v2242 = vld [vmem:[#allocation4 + $0x48] sm:$0xff]
      %v2243 = vld [vmem:[#allocation4 + $0x58] sm:$0xff]
      %v2244 = vld [vmem:[#allocation4 + $0x68] sm:$0xff]
      %v2245 = vld [vmem:[#allocation4 + $0x78] sm:$0xff]
      %v2246 = vxor.u32 %v2242, 2147483648
      %v2247 = vxor.u32 %v2243, 2147483648
      %v2248 = vxor.u32 %v2244, 2147483648
      %v2249 = vxor.u32 %v2245, 2147483648
      %v2250 = vmul.f32 %v2246, 1.442695
      %v2251 = vpow.pop %v2250
      %v2252 = vmul.f32 %v2247, 1.442695
      %v2253 = vpow.pop %v2252
      %v2254 = vmul.f32 %v2248, 1.442695
      %v2255 = vpow.pop %v2254
      %v2256 = vmul.f32 %v2249, 1.442695
      %v2257 = vpow.pop %v2256
      %v2258 = vadd.f32 %v2251, 1.0
      %v2259 = vadd.f32 %v2253, 1.0
      %v2260 = vadd.f32 %v2255, 1.0
      %v2261 = vadd.f32 %v2257, 1.0
      %v2262 = vrcp.pop %v2258
      %v2263 = vmul.f32 %v2258, %v2262
      %v2264 = vsub.f32 1.0, %v2263
      %v2265 = vmul.f32 %v2262, %v2264
      %v2266 = vadd.f32 %v2262, %v2265
      %vm2267 = vweird.f32 %v2258
      %vm2268 = vweird.f32 %v2262
      %vm2269 = vmor %vm2267, %vm2268
      %v2270 = vsel %vm2269, %v2262, %v2266
      %v2271 = vand.u32 2147483647, %v2258
      %vm2272 = vcmp.eq.f32.partialorder %v2271, 8.507059e+37
      %v2273 = vand.u32 %v2258, 2147483648
      %v2274 = vor.u32 1.1754944e-38, %v2273
      %v2275 = vsel %vm2272, %v2274, %v2270
      %v2276 = vmul.f32 1.0, %v2275
      %v2277 = vrcp.pop %v2259
      %v2278 = vmul.f32 %v2259, %v2277
      %v2279 = vsub.f32 1.0, %v2278
      %v2280 = vmul.f32 %v2277, %v2279
      %v2281 = vadd.f32 %v2277, %v2280
      %vm2282 = vweird.f32 %v2259
      %vm2283 = vweird.f32 %v2277
      %vm2284 = vmor %vm2282, %vm2283
      %v2285 = vsel %vm2284, %v2277, %v2281
      %v2286 = vand.u32 2147483647, %v2259
      %vm2287 = vcmp.eq.f32.partialorder %v2286, 8.507059e+37
      %v2288 = vand.u32 %v2259, 2147483648
      %v2289 = vor.u32 1.1754944e-38, %v2288
      %v2290 = vsel %vm2287, %v2289, %v2285
      %v2291 = vmul.f32 1.0, %v2290
      %v2292 = vrcp.pop %v2260
      %v2293 = vmul.f32 %v2260, %v2292
      %v2294 = vsub.f32 1.0, %v2293
      %v2295 = vmul.f32 %v2292, %v2294
      %v2296 = vadd.f32 %v2292, %v2295
      %vm2297 = vweird.f32 %v2260
      %vm2298 = vweird.f32 %v2292
      %vm2299 = vmor %vm2297, %vm2298
      %v2300 = vsel %vm2299, %v2292, %v2296
      %v2301 = vand.u32 2147483647, %v2260
      %vm2302 = vcmp.eq.f32.partialorder %v2301, 8.507059e+37
      %v2303 = vand.u32 %v2260, 2147483648
      %v2304 = vor.u32 1.1754944e-38, %v2303
      %v2305 = vsel %vm2302, %v2304, %v2300
      %v2306 = vmul.f32 1.0, %v2305
      %v2307 = vrcp.pop %v2261
      %v2308 = vmul.f32 %v2261, %v2307
      %v2309 = vsub.f32 1.0, %v2308
      %v2310 = vmul.f32 %v2307, %v2309
      %v2311 = vadd.f32 %v2307, %v2310
      %vm2312 = vweird.f32 %v2261
      %vm2313 = vweird.f32 %v2307
      %vm2314 = vmor %vm2312, %vm2313
      %v2315 = vsel %vm2314, %v2307, %v2311
      %v2316 = vand.u32 2147483647, %v2261
      %vm2317 = vcmp.eq.f32.partialorder %v2316, 8.507059e+37
      %v2318 = vand.u32 %v2261, 2147483648
      %v2319 = vor.u32 1.1754944e-38, %v2318
      %v2320 = vsel %vm2317, %v2319, %v2315
      %v2321 = vmul.f32 1.0, %v2320
      %v2322 = vld [vmem:[#allocation4 + $0x88] sm:$0xff]
      %v2323 = vld [vmem:[#allocation4 + $0x98] sm:$0xff]
      %v2324 = vld [vmem:[#allocation4 + $0xa8] sm:$0xff]
      %v2325 = vld [vmem:[#allocation4 + $0xb8] sm:$0xff]
      %v2326 = vxor.u32 %v2322, 2147483648
      %v2327 = vxor.u32 %v2323, 2147483648
      %v2328 = vxor.u32 %v2324, 2147483648
      %v2329 = vxor.u32 %v2325, 2147483648
      %v2330 = vmul.f32 %v2326, 1.442695
      %v2331 = vpow.pop %v2330
      %v2332 = vmul.f32 %v2327, 1.442695
      %v2333 = vpow.pop %v2332
      %v2334 = vmul.f32 %v2328, 1.442695
      %v2335 = vpow.pop %v2334
      %v2336 = vmul.f32 %v2329, 1.442695
      %v2337 = vpow.pop %v2336
      %v2338 = vadd.f32 %v2331, 1.0
      %v2339 = vadd.f32 %v2333, 1.0
      %v2340 = vadd.f32 %v2335, 1.0
      %v2341 = vadd.f32 %v2337, 1.0
      %v2342 = vrcp.pop %v2338
      %v2343 = vmul.f32 %v2338, %v2342
      %v2344 = vsub.f32 1.0, %v2343
      %v2345 = vmul.f32 %v2342, %v2344
      %v2346 = vadd.f32 %v2342, %v2345
      %vm2347 = vweird.f32 %v2338
      %vm2348 = vweird.f32 %v2342
      %vm2349 = vmor %vm2347, %vm2348
      %v2350 = vsel %vm2349, %v2342, %v2346
      %v2351 = vand.u32 2147483647, %v2338
      %vm2352 = vcmp.eq.f32.partialorder %v2351, 8.507059e+37
      %v2353 = vand.u32 %v2338, 2147483648
      %v2354 = vor.u32 1.1754944e-38, %v2353
      %v2355 = vsel %vm2352, %v2354, %v2350
      %v2356 = vmul.f32 1.0, %v2355
      %v2357 = vrcp.pop %v2339
      %v2358 = vmul.f32 %v2339, %v2357
      %v2359 = vsub.f32 1.0, %v2358
      %v2360 = vmul.f32 %v2357, %v2359
      %v2361 = vadd.f32 %v2357, %v2360
      %vm2362 = vweird.f32 %v2339
      %vm2363 = vweird.f32 %v2357
      %vm2364 = vmor %vm2362, %vm2363
      %v2365 = vsel %vm2364, %v2357, %v2361
      %v2366 = vand.u32 2147483647, %v2339
      %vm2367 = vcmp.eq.f32.partialorder %v2366, 8.507059e+37
      %v2368 = vand.u32 %v2339, 2147483648
      %v2369 = vor.u32 1.1754944e-38, %v2368
      %v2370 = vsel %vm2367, %v2369, %v2365
      %v2371 = vmul.f32 1.0, %v2370
      %v2372 = vrcp.pop %v2340
      %v2373 = vmul.f32 %v2340, %v2372
      %v2374 = vsub.f32 1.0, %v2373
      %v2375 = vmul.f32 %v2372, %v2374
      %v2376 = vadd.f32 %v2372, %v2375
      %vm2377 = vweird.f32 %v2340
      %vm2378 = vweird.f32 %v2372
      %vm2379 = vmor %vm2377, %vm2378
      %v2380 = vsel %vm2379, %v2372, %v2376
      %v2381 = vand.u32 2147483647, %v2340
      %vm2382 = vcmp.eq.f32.partialorder %v2381, 8.507059e+37
      %v2383 = vand.u32 %v2340, 2147483648
      %v2384 = vor.u32 1.1754944e-38, %v2383
      %v2385 = vsel %vm2382, %v2384, %v2380
      %v2386 = vmul.f32 1.0, %v2385
      %v2387 = vrcp.pop %v2341
      %v2388 = vmul.f32 %v2341, %v2387
      %v2389 = vsub.f32 1.0, %v2388
      %v2390 = vmul.f32 %v2387, %v2389
      %v2391 = vadd.f32 %v2387, %v2390
      %vm2392 = vweird.f32 %v2341
      %vm2393 = vweird.f32 %v2387
      %vm2394 = vmor %vm2392, %vm2393
      %v2395 = vsel %vm2394, %v2387, %v2391
      %v2396 = vand.u32 2147483647, %v2341
      %vm2397 = vcmp.eq.f32.partialorder %v2396, 8.507059e+37
      %v2398 = vand.u32 %v2341, 2147483648
      %v2399 = vor.u32 1.1754944e-38, %v2398
      %v2400 = vsel %vm2397, %v2399, %v2395
      %v2401 = vmul.f32 1.0, %v2400
      %v2402 = vld [vmem:[#allocation4 + $0xc8] sm:$0xff]
      %v2403 = vld [vmem:[#allocation4 + $0xd8] sm:$0xff]
      %v2404 = vld [vmem:[#allocation4 + $0xe8] sm:$0xff]
      %v2405 = vld [vmem:[#allocation4 + $0xf8] sm:$0xff]
      %v2406 = vtanh.pop %v2402
      %v2407 = vtanh.pop %v2403
      %v2408 = vtanh.pop %v2404
      %v2409 = vtanh.pop %v2405
      %v2410 = vld [vmem:[%s267 + $0x8] sm:$0xff]
      %v2411 = vld [vmem:[%s267 + $0x18] sm:$0xff]
      %v2412 = vld [vmem:[%s267 + $0x28] sm:$0xff]
      %v2413 = vld [vmem:[%s267 + $0x38] sm:$0xff]
      %v2414 = vmul.f32 %v2276, %v2410
      %v2415 = vmul.f32 %v2291, %v2411
      %v2416 = vmul.f32 %v2306, %v2412
      %v2417 = vmul.f32 %v2321, %v2413
      %v2418 = vmul.f32 %v2196, %v2406
      %v2419 = vmul.f32 %v2211, %v2407
      %v2420 = vmul.f32 %v2226, %v2408
      %v2421 = vmul.f32 %v2241, %v2409
      %v2422 = vadd.f32 %v2414, %v2418
      %v2423 = vadd.f32 %v2415, %v2419
      %v2424 = vadd.f32 %v2416, %v2420
      %v2425 = vadd.f32 %v2417, %v2421
      %v2426 = vtanh.pop %v2422
      %v2427 = vtanh.pop %v2423
      %v2428 = vtanh.pop %v2424
      %v2429 = vtanh.pop %v2425
      %v2430 = vmul.f32 %v2356, %v2426
      %v2431 = vmul.f32 %v2371, %v2427
      %v2432 = vmul.f32 %v2386, %v2428
      %v2433 = vmul.f32 %v2401, %v2429
      %2434 = vst [vmem:[%s272 + $0x8] sm:$0xff] %v2430
      %2435 = vst [vmem:[%s272 + $0x18] sm:$0xff] %v2431
      %2436 = vst [vmem:[%s272 + $0x28] sm:$0xff] %v2432
      %2437 = vst [vmem:[%s272 + $0x38] sm:$0xff] %v2433
      %2438 = vst [vmem:[%s277 + $0x8] sm:$0xff] %v2422
      %2439 = vst [vmem:[%s277 + $0x18] sm:$0xff] %v2423
      %2440 = vst [vmem:[%s277 + $0x28] sm:$0xff] %v2424
      %2441 = vst [vmem:[%s277 + $0x38] sm:$0xff] %v2425
      %p2442 = scmp.lt.s32.totalorder %s17, 1
      %s2443 = scalar_select %p2442, %s17, 1
      %s2444 = smul.addr %s2443, 8
      %s2445 = smul.addr %s2444, 8
      %s2446 = scalar_lea.vmem %s4, %s2445
      %p2447 = scmp.lt.s32.totalorder %s17, 1
      %s2448 = scalar_select %p2447, %s17, 1
      %s2449 = smul.addr %s2448, 8
      %s2450 = smul.addr %s2449, 8
      %s2451 = scalar_lea.vmem %s5, %s2450
      // Predicated region
      $region37: #{clstm_cell_forward.1} parent=35 // pred_check
        %p2452 = pneg %p134
      $region38: #{clstm_cell_forward.1} parent=35 // pred_check_branch
        %2454 = sbr.rel (%p2452) target = $region40
      $region39: #{clstm_cell_forward.1} parent=35 // pred_region
        _
      $region40: #{clstm_cell_forward.1} parent=35 // pred_fallthru
        _
      // Predicated region
      $region41: #{clstm_cell_forward.1} parent=35 // pred_check
        %p2455 = pneg %p160
      $region42: #{clstm_cell_forward.1} parent=35 // pred_check_branch
        %2457 = sbr.rel (%p2455) target = $region44
      $region43: #{clstm_cell_forward.1} parent=35 // pred_region
        _
      $region44: #{clstm_cell_forward.1} parent=35 // pred_fallthru
        _
    $region36: #{clstm_cell_forward.1} parent=5 // pred_fallthru
      _
    %p2458 = scmp.le.s32.totalorder 2, %s12
    // Predicated region
    $region45: #{clstm_cell_forward.1} parent=5 // pred_check
      %p2459 = pneg %p2458
    $region46: #{clstm_cell_forward.1} parent=5 // pred_check_branch
      %2461 = sbr.rel (%p2459) target = $region48
    $region47: #{clstm_cell_forward.1} parent=5 // pred_region
      %s2462 = ssub.s32 %s12, 2
      // Predicated region
      $region49: #{clstm_cell_forward.1} parent=47 // pred_check
        %p2463 = pneg %p140
      $region50: #{clstm_cell_forward.1} parent=47 // pred_check_branch
        %2465 = sbr.rel (%p2463) target = $region52
      $region51: #{clstm_cell_forward.1} parent=47 // pred_region
        %p2466 = scmp.lt.s32.totalorder %s18, 1
        %s2467 = scalar_select %p2466, %s18, 1
        %s2468 = smul.addr %s2467, 8
        %s2469 = smul.addr %s2468, 8
        %s2470 = scalar_lea.vmem %s4, %s2469
      $region52: #{clstm_cell_forward.1} parent=47 // pred_fallthru
        _
      // Predicated region
      $region53: #{clstm_cell_forward.1} parent=47 // pred_check
        %p2471 = pneg %p166
      $region54: #{clstm_cell_forward.1} parent=47 // pred_check_branch
        %2473 = sbr.rel (%p2471) target = $region56
      $region55: #{clstm_cell_forward.1} parent=47 // pred_region
        %p2474 = scmp.lt.s32.totalorder %s18, 1
        %s2475 = scalar_select %p2474, %s18, 1
        %s2476 = smul.addr %s2475, 8
        %s2477 = smul.addr %s2476, 8
        %s2478 = scalar_lea.vmem %s5, %s2477
      $region56: #{clstm_cell_forward.1} parent=47 // pred_fallthru
        _
    $region48: #{clstm_cell_forward.1} parent=5 // pred_fallthru
      _
  $region6: #{clstm_cell_forward.1} parent=0 // loop_footer
    %s16 = sadd.s32 1, %s12
  $region7: #{clstm_cell_forward.1} parent=0 // loop_footer_branch
    %11 = sbr.rel target = $region3
  $region8: #{clstm_cell_forward.1} parent=0 // loop_exit
    _

</llo_original>
